<compile_context>
chip_gen: v6e
topology: v6e:2x2x1
jax: 0.10.0
libtpu: 0.0.40
codegen_flags: <defaults>
</compile_context>

<pallas_src>
import functools

import numpy as np
import jax
import jax.numpy as jnp
from jax.experimental import pallas as pl
from jax.experimental.pallas import tpu as pltpu


# ----------------------------- Pallas kernel -----------------------------

def _msa_block_kernel(x_ref, g_ref, b_ref, o_ref, *, num_heads, eps, scale):
    """Fused: y = x + MHSA(LayerNorm(x)) for a (Bt, S, E) block.

    x_ref, o_ref : (Bt, S, E)      g_ref, b_ref : (1, E) LN affine params
    """
    xb = x_ref[...].astype(jnp.float32)                       # (Bt, S, E)
    bt, _, e = xb.shape
    dh = e // num_heads

    # ---- LayerNorm (f32 VPU math) ----
    mu = jnp.mean(xb, axis=-1, keepdims=True)
    xc = xb - mu
    var = jnp.mean(xc * xc, axis=-1, keepdims=True)
    nrm = (xc * jax.lax.rsqrt(var + eps)
           * g_ref[...].astype(jnp.float32)
           + b_ref[...].astype(jnp.float32))                  # (Bt, S, E)
    # (xb is not reused below; the residual re-reads x_ref at the end.)

    # ---- Fold heads into a single MXU batch dim: (H*Bt, S, Dh) ----
    heads = [nrm[:, :, h * dh:(h + 1) * dh] for h in range(num_heads)]
    kv = jnp.concatenate(heads, axis=0)                       # (H*Bt, S, Dh) head-major
    k_bf = kv.astype(jnp.bfloat16)                            # single bf16 cast
    q_bf = (kv * scale).astype(jnp.bfloat16)                  # fold 1/sqrt(Dh) into q

    # ---- Scores for all heads/batch in one batched MXU pass ----
    s = jnp.einsum('bqd,bkd->bqk', q_bf, k_bf,
                   preferred_element_type=jnp.float32)        # (H*Bt, S, S) f32

    # ---- Softmax numerator only; denominator applied after PV ----
    m = jnp.max(s, axis=-1, keepdims=True)
    p = jnp.exp(s - m)                                        # unnormalized probs
    denom = jnp.sum(p, axis=-1, keepdims=True)

    # ---- PV matmul (batched), then normalize the small (S, Dh) result ----
    o = jnp.einsum('bqk,bkd->bqd', p.astype(jnp.bfloat16), k_bf,
                   preferred_element_type=jnp.float32)        # (H*Bt, S, Dh) f32
    o = o * pl.reciprocal(denom, approx=True)                 # EUP slot, post-PV scaling

    # ---- Reassemble lane-dense (Bt, S, E) output ----
    attn = jnp.concatenate(
        [o[h * bt:(h + 1) * bt] for h in range(num_heads)], axis=-1)

    # ---- Residual: fresh read of x_ref (keeps vreg pressure low above) ----
    o_ref[...] = (x_ref[...].astype(jnp.float32) + attn).astype(o_ref.dtype)


# ----------------------------- wrapper -----------------------------

def msa_block_forward(x, gamma, beta, *, num_heads, eps=1e-5):
    """x: [B, S, E];  gamma, beta: [E]  ->  [B, S, E] (same dtype as x)."""
    B, S, E = x.shape
    assert E % num_heads == 0, "Embedding dimension must be divisible by number of heads."
    assert E % 128 == 0, "E must be a multiple of 128 for lane-dense blocks."
    dh = E // num_heads
    scale = 1.0 / float(np.sqrt(dh))

    # Two grid steps when possible so v7x's two TensorCores both get work;
    # each step owns Bt = B // grid_b batch elements (amortizes step overhead).
    grid_b = 2 if (B >= 2 and B % 2 == 0) else 1
    Bt = B // grid_b

    kernel = functools.partial(_msa_block_kernel,
                               num_heads=num_heads, eps=eps, scale=scale)

    cost = pl.CostEstimate(
        flops=4 * B * num_heads * S * S * dh,          # QK^T + PV, 2 flops/MAC
        transcendentals=B * num_heads * S * S,         # exp in softmax
        bytes_accessed=2 * B * S * E * x.dtype.itemsize)

    return pl.pallas_call(
        kernel,
        out_shape=jax.ShapeDtypeStruct((B, S, E), x.dtype),
        grid=(grid_b,),
        in_specs=[
            pl.BlockSpec((Bt, S, E), lambda b: (b, 0, 0)),   # x: Bt batch elements
            pl.BlockSpec((1, E), lambda b: (0, 0)),          # LN weight
            pl.BlockSpec((1, E), lambda b: (0, 0)),          # LN bias
        ],
        out_specs=pl.BlockSpec((Bt, S, E), lambda b: (b, 0, 0)),
        compiler_params=pltpu.CompilerParams(
            dimension_semantics=("parallel",)),              # batch split across TCs (v7x)
        cost_estimate=cost,
    )(x, gamma.reshape(1, E), beta.reshape(1, E))
    # TODO(synk): for long sequences (S >~ 2K, esp. on v7x's 64 MiB VMEM), switch to a
    # flash-style KV-tiled variant (second "arbitrary" grid axis over S//tk with online
    # softmax, tq~256-512, tk~512) and set vmem_limit_bytes explicitly.


# ----------------------------- pure-JAX reference -----------------------------

def msa_block_ref(x, gamma, beta, num_heads, eps=1e-5):
    B, S, E = x.shape
    dh = E // num_heads
    mu = jnp.mean(x, axis=-1, keepdims=True)
    var = jnp.mean((x - mu) ** 2, axis=-1, keepdims=True)
    nrm = (x - mu) * jax.lax.rsqrt(var + eps) * gamma + beta
    q = nrm.reshape(B, S, num_heads, dh).transpose(0, 2, 1, 3)       # (B, H, S, Dh)
    s = jnp.einsum("bhqd,bhkd->bhqk", q, q) / jnp.sqrt(dh)
    p = jax.nn.softmax(s, axis=-1)
    o = jnp.einsum("bhqk,bhkd->bhqd", p, q)
    o = o.transpose(0, 2, 1, 3).reshape(B, S, E)
    return x + o


# ----------------------------- main -----------------------------

if __name__ == "__main__":
    B, S, E, H = 8, 16, 128, 4          # small config; E=128 keeps stores lane-dense

    key = jax.random.PRNGKey(0)
    kx, kg, kb = jax.random.split(key, 3)
    x = jax.random.normal(kx, (B, S, E), jnp.float32)
    gamma = 1.0 + 0.1 * jax.random.normal(kg, (E,), jnp.float32)
    beta = 0.1 * jax.random.normal(kb, (E,), jnp.float32)

    out = msa_block_forward(x, gamma, beta, num_heads=H)
    out = jax.block_until_ready(out)

    assert out.shape == (B, S, E)
    assert bool(jnp.all(jnp.isfinite(out)))
    ref = msa_block_ref(x, gamma, beta, H)
    np.testing.assert_allclose(np.asarray(out), np.asarray(ref), atol=3e-2, rtol=3e-2)
    print("KERNEL_OK")
</pallas_src>

<mosaic_0001>
module attributes {stable_mosaic.version = 11 : i64} {
  func.func @_msa_block_kernel(%arg0: i32, %arg1: memref<4x16x128xf32, #tpu.memory_space<vmem>>, %arg2: memref<1x128xf32, #tpu.memory_space<vmem>>, %arg3: memref<1x128xf32, #tpu.memory_space<vmem>>, %arg4: memref<4x16x128xf32, #tpu.memory_space<vmem>>) attributes {dimension_semantics = [#tpu.dimension_semantics<parallel>], iteration_bounds = array<i64: 2>, scalar_prefetch = 0 : i64, scratch_operands = 0 : i64, tpu.core_type = #tpu.core_type<tc>, window_params = [{transform_indices = @transform_0, window_bounds = array<i64: 4, 16, 128>}, {pipeline_mode = #tpu.pipeline_mode<synchronous>, transform_indices = @transform_1, window_bounds = array<i64: 1, 128>}, {pipeline_mode = #tpu.pipeline_mode<synchronous>, transform_indices = @transform_2, window_bounds = array<i64: 1, 128>}, {transform_indices = @transform_3, window_bounds = array<i64: 4, 16, 128>}]} {
    %c0 = arith.constant 0 : index
    %c0_0 = arith.constant 0 : index
    %c0_1 = arith.constant 0 : index
    %0 = vector.load %arg1[%c0, %c0_0, %c0_1] : memref<4x16x128xf32, #tpu.memory_space<vmem>>, vector<4x16x128xf32>
    %cst = arith.constant dense<0.000000e+00> : vector<4x16xf32>
    %1 = vector.multi_reduction <add>, %0, %cst [2] : vector<4x16x128xf32> to vector<4x16xf32>
    %2 = vector.shape_cast %1 : vector<4x16xf32> to vector<4x16x1xf32>
    %cst_2 = arith.constant 1.280000e+02 : f32
    %3 = vector.broadcast %cst_2 : f32 to vector<4x16x1xf32>
    %4 = arith.divf %2, %3 : vector<4x16x1xf32>
    %5 = vector.broadcast %4 : vector<4x16x1xf32> to vector<4x16x128xf32>
    %6 = arith.subf %0, %5 : vector<4x16x128xf32>
    %7 = arith.mulf %6, %6 : vector<4x16x128xf32>
    %cst_3 = arith.constant dense<0.000000e+00> : vector<4x16xf32>
    %8 = vector.multi_reduction <add>, %7, %cst_3 [2] : vector<4x16x128xf32> to vector<4x16xf32>
    %9 = vector.shape_cast %8 : vector<4x16xf32> to vector<4x16x1xf32>
    %cst_4 = arith.constant 1.280000e+02 : f32
    %10 = vector.broadcast %cst_4 : f32 to vector<4x16x1xf32>
    %11 = arith.divf %9, %10 : vector<4x16x1xf32>
    %cst_5 = arith.constant 9.99999974E-6 : f32
    %12 = vector.broadcast %cst_5 : f32 to vector<4x16x1xf32>
    %13 = arith.addf %11, %12 : vector<4x16x1xf32>
    %14 = math.rsqrt %13 : vector<4x16x1xf32>
    %15 = vector.broadcast %14 : vector<4x16x1xf32> to vector<4x16x128xf32>
    %16 = arith.mulf %6, %15 : vector<4x16x128xf32>
    %c0_6 = arith.constant 0 : index
    %c0_7 = arith.constant 0 : index
    %17 = vector.load %arg2[%c0_6, %c0_7] : memref<1x128xf32, #tpu.memory_space<vmem>>, vector<1x128xf32>
    %18 = vector.shape_cast %17 : vector<1x128xf32> to vector<1x1x128xf32>
    %19 = vector.broadcast %18 : vector<1x1x128xf32> to vector<4x16x128xf32>
    %20 = arith.mulf %16, %19 : vector<4x16x128xf32>
    %c0_8 = arith.constant 0 : index
    %c0_9 = arith.constant 0 : index
    %21 = vector.load %arg3[%c0_8, %c0_9] : memref<1x128xf32, #tpu.memory_space<vmem>>, vector<1x128xf32>
    %22 = vector.shape_cast %21 : vector<1x128xf32> to vector<1x1x128xf32>
    %23 = vector.broadcast %22 : vector<1x1x128xf32> to vector<4x16x128xf32>
    %24 = arith.addf %20, %23 : vector<4x16x128xf32>
    %25 = vector.extract_strided_slice %24 {offsets = [0, 0, 0], sizes = [4, 16, 32], strides = [1, 1, 1]} : vector<4x16x128xf32> to vector<4x16x32xf32>
    %26 = vector.extract_strided_slice %24 {offsets = [0, 0, 32], sizes = [4, 16, 32], strides = [1, 1, 1]} : vector<4x16x128xf32> to vector<4x16x32xf32>
    %27 = vector.extract_strided_slice %24 {offsets = [0, 0, 64], sizes = [4, 16, 32], strides = [1, 1, 1]} : vector<4x16x128xf32> to vector<4x16x32xf32>
    %28 = vector.extract_strided_slice %24 {offsets = [0, 0, 96], sizes = [4, 16, 32], strides = [1, 1, 1]} : vector<4x16x128xf32> to vector<4x16x32xf32>
    %29 = tpu.concatenate %25, %26, %27, %28 in 0 : vector<4x16x32xf32>, vector<4x16x32xf32>, vector<4x16x32xf32>, vector<4x16x32xf32> -> vector<16x16x32xf32>
    %30 = arith.truncf %29 : vector<16x16x32xf32> to vector<16x16x32xbf16>
    %cst_10 = arith.constant 0.176776692 : f32
    %31 = vector.broadcast %cst_10 : f32 to vector<16x16x32xf32>
    %32 = arith.mulf %29, %31 : vector<16x16x32xf32>
    %33 = arith.truncf %32 : vector<16x16x32xf32> to vector<16x16x32xbf16>
    "tpu.trace_start"() <{level = 10 : i32, message = "bqd,bkd->bqk"}> : () -> ()
    %cst_11 = arith.constant dense<0.000000e+00> : vector<16x16x16xf32>
    %34 = tpu.matmul %33, %30, %cst_11 {dimension_numbers = #tpu.dot_dimension_numbers<[2], [2], [1], [1], [0, 0, 0, 1, 1, 1], [0], [0]>} : vector<16x16x32xbf16>, vector<16x16x32xbf16>, vector<16x16x16xf32> -> vector<16x16x16xf32>
    "tpu.trace_stop"() : () -> ()
    %cst_12 = arith.constant dense<0xFF800000> : vector<16x16xf32>
    %35 = vector.multi_reduction <maximumf>, %34, %cst_12 [2] : vector<16x16x16xf32> to vector<16x16xf32>
    %36 = vector.shape_cast %35 : vector<16x16xf32> to vector<16x16x1xf32>
    %37 = vector.broadcast %36 : vector<16x16x1xf32> to vector<16x16x16xf32>
    %38 = arith.subf %34, %37 : vector<16x16x16xf32>
    %39 = math.exp %38 : vector<16x16x16xf32>
    %cst_13 = arith.constant dense<0.000000e+00> : vector<16x16xf32>
    %40 = vector.multi_reduction <add>, %39, %cst_13 [2] : vector<16x16x16xf32> to vector<16x16xf32>
    %41 = vector.shape_cast %40 : vector<16x16xf32> to vector<16x16x1xf32>
    %42 = arith.truncf %39 : vector<16x16x16xf32> to vector<16x16x16xbf16>
    "tpu.trace_start"() <{level = 10 : i32, message = "bqk,bkd->bqd"}> : () -> ()
    %cst_14 = arith.constant dense<0.000000e+00> : vector<16x16x32xf32>
    %43 = tpu.matmul %42, %30, %cst_14 {dimension_numbers = #tpu.dot_dimension_numbers<[2], [1], [1], [2], [0, 0, 0, 1, 1, 2], [0], [0]>} : vector<16x16x16xbf16>, vector<16x16x32xbf16>, vector<16x16x32xf32> -> vector<16x16x32xf32>
    "tpu.trace_stop"() : () -> ()
    %44 = tpu.reciprocal %41 {approx = true} : vector<16x16x1xf32> -> vector<16x16x1xf32>
    %45 = vector.broadcast %44 : vector<16x16x1xf32> to vector<16x16x32xf32>
    %46 = arith.mulf %43, %45 : vector<16x16x32xf32>
    %47 = vector.extract_strided_slice %46 {offsets = [0, 0, 0], sizes = [4, 16, 32], strides = [1, 1, 1]} : vector<16x16x32xf32> to vector<4x16x32xf32>
    %48 = vector.extract_strided_slice %46 {offsets = [4, 0, 0], sizes = [4, 16, 32], strides = [1, 1, 1]} : vector<16x16x32xf32> to vector<4x16x32xf32>
    %49 = vector.extract_strided_slice %46 {offsets = [8, 0, 0], sizes = [4, 16, 32], strides = [1, 1, 1]} : vector<16x16x32xf32> to vector<4x16x32xf32>
    %50 = vector.extract_strided_slice %46 {offsets = [12, 0, 0], sizes = [4, 16, 32], strides = [1, 1, 1]} : vector<16x16x32xf32> to vector<4x16x32xf32>
    %51 = tpu.concatenate %47, %48, %49, %50 in 2 : vector<4x16x32xf32>, vector<4x16x32xf32>, vector<4x16x32xf32>, vector<4x16x32xf32> -> vector<4x16x128xf32>
    %c0_15 = arith.constant 0 : index
    %c0_16 = arith.constant 0 : index
    %c0_17 = arith.constant 0 : index
    %52 = vector.load %arg1[%c0_15, %c0_16, %c0_17] : memref<4x16x128xf32, #tpu.memory_space<vmem>>, vector<4x16x128xf32>
    %53 = arith.addf %52, %51 : vector<4x16x128xf32>
    %c0_18 = arith.constant 0 : index
    %c0_19 = arith.constant 0 : index
    %c0_20 = arith.constant 0 : index
    %54 = vector.load %arg4[%c0_18, %c0_19, %c0_20] : memref<4x16x128xf32, #tpu.memory_space<vmem>>, vector<4x16x128xf32>
    tpu.vector_store %arg4[%c0_18, %c0_19, %c0_20], %53 {strides = array<i32>} : memref<4x16x128xf32, #tpu.memory_space<vmem>>, vector<4x16x128xf32>,
    return
  }
  func.func @transform_0(%arg0: i32) -> (i32, i32, i32) {
    %c0_i32 = arith.constant 0 : i32
    %c0_i32_0 = arith.constant 0 : i32
    %c0_i32_1 = arith.constant 0 : i32
    return %arg0, %c0_i32, %c0_i32_0 : i32, i32, i32
  }
  func.func @transform_1(%arg0: i32) -> (i32, i32) {
    %c0_i32 = arith.constant 0 : i32
    %c0_i32_0 = arith.constant 0 : i32
    %c0_i32_1 = arith.constant 0 : i32
    return %c0_i32, %c0_i32_0 : i32, i32
  }
  func.func @transform_2(%arg0: i32) -> (i32, i32) {
    %c0_i32 = arith.constant 0 : i32
    %c0_i32_0 = arith.constant 0 : i32
    %c0_i32_1 = arith.constant 0 : i32
    return %c0_i32, %c0_i32_0 : i32, i32
  }
  func.func @transform_3(%arg0: i32) -> (i32, i32, i32) {
    %c0_i32 = arith.constant 0 : i32
    %c0_i32_0 = arith.constant 0 : i32
    %c0_i32_1 = arith.constant 0 : i32
    return %arg0, %c0_i32, %c0_i32_0 : i32, i32, i32
  }
}

</mosaic_0001>

<llo_original>
// kernel: tpu_custom_call.1
$region0: #{tpu_custom_call.1}
  #allocation0 [shape = 'u32[]', space=smem, size = 0x4, offset = 0x4, fixed_abs, tag = 'smem constant byte address 0x4 - core index']
  #allocation1 [shape = 'u32[144,128]{1,0:T(1,128)}', space=vmem, size = 0x12000, scoped, tag = 'internal scratch']
  %s0 = inlined_call_operand.hbm [shape: f32[8,16,128], index: 0, kind: input, shape index: {}]
  %s1 = inlined_call_operand.vmem [shape: f32[1,128], index: 1, kind: input, shape index: {}]
  %s2 = inlined_call_operand.vmem [shape: f32[1,128], index: 2, kind: input, shape index: {}]
  %s3 = inlined_call_operand.hbm [shape: f32[8,16,128], index: 3, kind: output, shape index: {}]
  %s4 = sld [smem:[#allocation0]]
  $region49: #{tpu_custom_call.1} parent=0
    _
  %s6 = ssub.s32 1, %s4
  %s7 = scalar_select 0, %s6, %s4
  $region1: #{tpu_custom_call.1} parent=0
    #allocation2 [shape = 'u8[65536]{0}', space=vmem, size = 0x10000, scoped, tag = 'input window, operand 0']
    #allocation3 [shape = 's32[2]{0}', space=sflag, size = 0x8, scoped, tag = 'scoped memory for tpu_custom_call.1']
    #allocation4 [shape = 's32[2]{0}', space=sflag, size = 0x8, scoped, tag = 'scoped memory for tpu_custom_call.1']
    #allocation5 [shape = 'u8[65536]{0}', space=vmem, size = 0x10000, scoped, tag = 'output window, operand 0']
    %8 = vsyncpa [#allocation3], 0
    %s9 = scalar_lea.sflag [#allocation3], 1
    %10 = vsyncpa %s9, 0
    %11 = vsyncpa [#allocation4], 0
    %s12 = scalar_lea.sflag [#allocation4], 1
    %13 = vsyncpa %s12, 0
    loop: start=0, step=1, limit=4
    $region2: #{tpu_custom_call.1} parent=1 // loop_pre_header
      _
    $region3: #{tpu_custom_call.1} parent=1 // loop_header
      %s15 = sphi 0, %s19
      %p16 = scmp.ge.s32.totalorder %s15, 4
      %s25 = sphi 0, %s27
      %s28 = sphi 0, %s25
      %s29 = sphi 0, %s28
      %s45 = sphi 0, %s29
      %s49 = sphi 0, %s49
      %s51 = sphi 0, %s49
      %s52 = sphi 0, %s51
      %s66 = sphi 0, %s52
      %s70 = sphi 0, %s70
      %s72 = sphi 0, %s70
      %s73 = sphi 0, %s72
      %s87 = sphi 0, %s73
      %s93 = sphi 0, %s95
      %s96 = sphi 0, %s93
      %s97 = sphi 0, %s96
      %s113 = sphi 0, %s97
    $region4: #{tpu_custom_call.1} parent=1 // loop_header_branch
      %18 = sbr.rel (%p16) target = $region8
    $region5: #{tpu_custom_call.1} parent=1 // loop_body
      %s20 = ssub.s32 %s15, 1
      %s21 = ssub.s32 %s15, 2
      %s22 = sadd.s32 %s15, 1
      %s23 = ssub.s32 %s15, %s22
      %p24 = scmp.eq.s32.totalorder %s23, 0
      %s26 = sadd.s32 %s25, 1
      %s27 = scalar_select %p24, %s25, %s26
      %p30 = pneg %p24
      %p31 = scmp.eq.s32.totalorder %s15, 1
      %p32 = por %p30, %p31
      %p33 = scmp.ne.s32.totalorder %s25, %s28
      %p34 = scmp.eq.s32.totalorder %s15, 0
      %p35 = por %p33, %p34
      %p36 = scmp.ne.s32.totalorder %s25, %s28
      %p37 = scmp.eq.s32.totalorder %s20, 1
      %p38 = por %p36, %p37
      %p39 = scmp.ne.s32.totalorder %s28, %s29
      %p40 = scmp.eq.s32.totalorder %s20, 0
      %p41 = por %p39, %p40
      %p42 = scmp.ne.s32.totalorder %s28, %s29
      %p43 = scmp.eq.s32.totalorder %s21, 1
      %p44 = por %p42, %p43
      %p46 = scmp.ne.s32.totalorder %s29, %s45
      %p47 = scmp.eq.s32.totalorder %s21, 0
      %p48 = por %p46, %p47
      %s50 = sadd.s32 %s49, 1
      %p53 = scmp.eq.s32.totalorder %s15, 1
      %p54 = scmp.ne.s32.totalorder %s49, %s51
      %p55 = scmp.eq.s32.totalorder %s15, 0
      %p56 = por %p54, %p55
      %p57 = scmp.ne.s32.totalorder %s49, %s51
      %p58 = scmp.eq.s32.totalorder %s20, 1
      %p59 = por %p57, %p58
      %p60 = scmp.ne.s32.totalorder %s51, %s52
      %p61 = scmp.eq.s32.totalorder %s20, 0
      %p62 = por %p60, %p61
      %p63 = scmp.ne.s32.totalorder %s51, %s52
      %p64 = scmp.eq.s32.totalorder %s21, 1
      %p65 = por %p63, %p64
      %p67 = scmp.ne.s32.totalorder %s52, %s66
      %p68 = scmp.eq.s32.totalorder %s21, 0
      %p69 = por %p67, %p68
      %s71 = sadd.s32 %s70, 1
      %p74 = scmp.eq.s32.totalorder %s15, 1
      %p75 = scmp.ne.s32.totalorder %s70, %s72
      %p76 = scmp.eq.s32.totalorder %s15, 0
      %p77 = por %p75, %p76
      %p78 = scmp.ne.s32.totalorder %s70, %s72
      %p79 = scmp.eq.s32.totalorder %s20, 1
      %p80 = por %p78, %p79
      %p81 = scmp.ne.s32.totalorder %s72, %s73
      %p82 = scmp.eq.s32.totalorder %s20, 0
      %p83 = por %p81, %p82
      %p84 = scmp.ne.s32.totalorder %s72, %s73
      %p85 = scmp.eq.s32.totalorder %s21, 1
      %p86 = por %p84, %p85
      %p88 = scmp.ne.s32.totalorder %s73, %s87
      %p89 = scmp.eq.s32.totalorder %s21, 0
      %p90 = por %p88, %p89
      %s91 = ssub.s32 %s15, %s22
      %p92 = scmp.eq.s32.totalorder %s91, 0
      %s94 = sadd.s32 %s93, 1
      %s95 = scalar_select %p92, %s93, %s94
      %p98 = pneg %p92
      %p99 = scmp.eq.s32.totalorder %s15, 1
      %p100 = por %p98, %p99
      %p101 = scmp.ne.s32.totalorder %s93, %s96
      %p102 = scmp.eq.s32.totalorder %s15, 0
      %p103 = por %p101, %p102
      %p104 = scmp.ne.s32.totalorder %s93, %s96
      %p105 = scmp.eq.s32.totalorder %s20, 1
      %p106 = por %p104, %p105
      %p107 = scmp.ne.s32.totalorder %s96, %s97
      %p108 = scmp.eq.s32.totalorder %s20, 0
      %p109 = por %p107, %p108
      %p110 = scmp.ne.s32.totalorder %s96, %s97
      %p111 = scmp.eq.s32.totalorder %s21, 1
      %p112 = por %p110, %p111
      %p114 = scmp.ne.s32.totalorder %s97, %s113
      %p115 = scmp.eq.s32.totalorder %s21, 0
      %p116 = por %p114, %p115
      %p117 = scmp.le.s32.totalorder 1, %s15
      %p118 = scmp.lt.s32.totalorder %s15, 3
      %p119 = pnand %p117, %p118
      %p120 = pneg %p119
      // Predicated region
      $region9: #{tpu_custom_call.1} parent=5 // pred_check
        _
      $region10: #{tpu_custom_call.1} parent=5 // pred_check_branch
        %122 = sbr.rel (%p119) target = $region12
      $region11: #{tpu_custom_call.1} parent=5 // pred_region
        %s123 = ssub.s32 %s15, 1
        // Predicated region
        $region13: #{tpu_custom_call.1} parent=11 // pred_check
          %p124 = pneg %p62
        $region14: #{tpu_custom_call.1} parent=11 // pred_check_branch
          %126 = sbr.rel (%p124) target = $region16
        $region15: #{tpu_custom_call.1} parent=11 // pred_region
          _
        $region16: #{tpu_custom_call.1} parent=11 // pred_fallthru
          _
        // Predicated region
        $region17: #{tpu_custom_call.1} parent=11 // pred_check
          %p127 = pneg %p83
        $region18: #{tpu_custom_call.1} parent=11 // pred_check_branch
          %129 = sbr.rel (%p127) target = $region20
        $region19: #{tpu_custom_call.1} parent=11 // pred_region
          _
        $region20: #{tpu_custom_call.1} parent=11 // pred_fallthru
          _
      $region12: #{tpu_custom_call.1} parent=5 // pred_fallthru
        _
      %p130 = scmp.lt.s32.totalorder %s15, 2
      // Predicated region
      $region21: #{tpu_custom_call.1} parent=5 // pred_check
        %p131 = pneg %p130
      $region22: #{tpu_custom_call.1} parent=5 // pred_check_branch
        %133 = sbr.rel (%p131) target = $region24
      $region23: #{tpu_custom_call.1} parent=5 // pred_region
        // Predicated region
        $region25: #{tpu_custom_call.1} parent=23 // pred_check
          %p134 = pneg %p35
        $region26: #{tpu_custom_call.1} parent=23 // pred_check_branch
          %136 = sbr.rel (%p134) target = $region28
        $region27: #{tpu_custom_call.1} parent=23 // pred_region
          %s137 = sand.u32 %s25, 1
          %s138 = scalar_lea.sflag [#allocation3], %s137
          %s139 = sand.u32 %s25, 1
          %s140 = smul.addr %s139, 64
          %s141 = scalar_lea.vmem [#allocation2], %s140
          %s142 = smul.u32 4, %s15
          %s144 = ssub.s32 1024, 1024
          %145 = vsyncadd %s138, %s144
          %s146 = smul.addr %s142, 2
          %s147 = smul.addr %s146, 128
          %s148 = scalar_lea.hbm %s0, %s147
          %s149 = sshll.u32 %s141, 4
          %s150 = int_to_ptr.vmem [resolvable:$true] %s149
          %155 = dma.hbm_to_vmem [thread:$0]  %s148, 1024, %s150, %s138, 128, 128, 8
        $region28: #{tpu_custom_call.1} parent=23 // pred_fallthru
          _
      $region24: #{tpu_custom_call.1} parent=5 // pred_fallthru
        _
      %p156 = scmp.le.s32.totalorder 1, %s15
      %p157 = scmp.lt.s32.totalorder %s15, 3
      %p158 = pnand %p156, %p157
      %p159 = pneg %p158
      // Predicated region
      $region29: #{tpu_custom_call.1} parent=5 // pred_check
        _
      $region30: #{tpu_custom_call.1} parent=5 // pred_check_branch
        %161 = sbr.rel (%p158) target = $region32
      $region31: #{tpu_custom_call.1} parent=5 // pred_region
        %s162 = ssub.s32 %s15, 1
        %s163 = sand.u32 %s28, 1
        %s164 = scalar_lea.sflag [#allocation3], %s163
        %s165 = sand.u32 %s28, 1
        %s166 = smul.addr %s165, 64
        %s167 = scalar_lea.vmem [#allocation2], %s166
        // Predicated region
        $region33: #{tpu_custom_call.1} parent=31 // pred_check
          %p168 = pneg %p41
        $region34: #{tpu_custom_call.1} parent=31 // pred_check_branch
          %170 = sbr.rel (%p168) target = $region36
        $region35: #{tpu_custom_call.1} parent=31 // pred_region
          %171 = dma.done %s164, 1024
        $region36: #{tpu_custom_call.1} parent=31 // pred_fallthru
          _
        %s172 = sand.u32 %s28, 1
        %s173 = scalar_lea.sflag [#allocation3], %s172
        %s174 = sand.u32 %s28, 1
        %s175 = smul.addr %s174, 64
        %s176 = scalar_lea.vmem [#allocation2], %s175
        %p177 = pneg %p41
        %p178 = pneg %p38
        %p179 = pneg %p62
        %p180 = pneg %p59
        %p181 = pneg %p83
        %p182 = pneg %p80
        %p183 = pneg %p109
        %p184 = pneg %p106
        %s185 = sand.u32 %s96, 1
        %s186 = scalar_lea.sflag [#allocation4], %s185
        %s187 = sand.u32 %s96, 1
        %s188 = smul.addr %s187, 64
        %s189 = scalar_lea.vmem [#allocation5], %s188
        %s190 = smul.u32 4, %s20
        %s191 = smul.u32 4, %s20
        %v193 = vld [vmem:[%s167] sm:$0xff]
        %v194 = vld [vmem:[%s167 + $0x8] sm:$0xff]
        %v195 = vld [vmem:[%s167 + $0x10] sm:$0xff]
        %v196 = vld [vmem:[%s167 + $0x18] sm:$0xff]
        %v197 = vld [vmem:[%s167 + $0x20] sm:$0xff]
        %v198 = vld [vmem:[%s167 + $0x28] sm:$0xff]
        %v199 = vld [vmem:[%s167 + $0x30] sm:$0xff]
        %v200 = vld [vmem:[%s167 + $0x38] sm:$0xff]
        %201 = vadd.xlane.f32.xlu0 %v193
        %v202 = vpop.xlane.xlu0 %201
        %203 = vadd.xlane.f32.xlu0 %v194
        %v204 = vpop.xlane.xlu0 %203
        %205 = vadd.xlane.f32.xlu0 %v195
        %v206 = vpop.xlane.xlu0 %205
        %207 = vadd.xlane.f32.xlu0 %v196
        %v208 = vpop.xlane.xlu0 %207
        %209 = vadd.xlane.f32.xlu0 %v197
        %v210 = vpop.xlane.xlu0 %209
        %211 = vadd.xlane.f32.xlu0 %v198
        %v212 = vpop.xlane.xlu0 %211
        %213 = vadd.xlane.f32.xlu0 %v199
        %v214 = vpop.xlane.xlu0 %213
        %215 = vadd.xlane.f32.xlu0 %v200
        %v216 = vpop.xlane.xlu0 %215
        %v217 = vrcp.pop 128.0
        %v218 = vmul.f32 %v202, %v217
        %v219 = vmul.f32 %v204, %v217
        %v220 = vmul.f32 %v206, %v217
        %v221 = vmul.f32 %v208, %v217
        %v222 = vmul.f32 %v210, %v217
        %v223 = vmul.f32 %v212, %v217
        %v224 = vmul.f32 %v214, %v217
        %v225 = vmul.f32 %v216, %v217
        %v226 = vsub.f32 %v193, %v218
        %v227 = vsub.f32 %v194, %v219
        %v228 = vsub.f32 %v195, %v220
        %v229 = vsub.f32 %v196, %v221
        %v230 = vsub.f32 %v197, %v222
        %v231 = vsub.f32 %v198, %v223
        %v232 = vsub.f32 %v199, %v224
        %v233 = vsub.f32 %v200, %v225
        %v234 = vmul.f32 %v226, %v226
        %v235 = vmul.f32 %v227, %v227
        %v236 = vmul.f32 %v228, %v228
        %v237 = vmul.f32 %v229, %v229
        %v238 = vmul.f32 %v230, %v230
        %v239 = vmul.f32 %v231, %v231
        %v240 = vmul.f32 %v232, %v232
        %v241 = vmul.f32 %v233, %v233
        %242 = vadd.xlane.f32.xlu0 %v234
        %v243 = vpop.xlane.xlu0 %242
        %244 = vadd.xlane.f32.xlu0 %v235
        %v245 = vpop.xlane.xlu0 %244
        %246 = vadd.xlane.f32.xlu0 %v236
        %v247 = vpop.xlane.xlu0 %246
        %248 = vadd.xlane.f32.xlu0 %v237
        %v249 = vpop.xlane.xlu0 %248
        %250 = vadd.xlane.f32.xlu0 %v238
        %v251 = vpop.xlane.xlu0 %250
        %252 = vadd.xlane.f32.xlu0 %v239
        %v253 = vpop.xlane.xlu0 %252
        %254 = vadd.xlane.f32.xlu0 %v240
        %v255 = vpop.xlane.xlu0 %254
        %256 = vadd.xlane.f32.xlu0 %v241
        %v257 = vpop.xlane.xlu0 %256
        %v258 = vmul.f32 %v243, %v217
        %v259 = vmul.f32 %v245, %v217
        %v260 = vmul.f32 %v247, %v217
        %v261 = vmul.f32 %v249, %v217
        %v262 = vmul.f32 %v251, %v217
        %v263 = vmul.f32 %v253, %v217
        %v264 = vmul.f32 %v255, %v217
        %v265 = vmul.f32 %v257, %v217
        %v266 = vadd.f32 %v258, 1e-05
        %v267 = vadd.f32 %v259, 1e-05
        %v268 = vadd.f32 %v260, 1e-05
        %v269 = vadd.f32 %v261, 1e-05
        %v270 = vadd.f32 %v262, 1e-05
        %v271 = vadd.f32 %v263, 1e-05
        %v272 = vadd.f32 %v264, 1e-05
        %v273 = vadd.f32 %v265, 1e-05
        %v274 = vrsqrt.pop %v266
        %v275 = vrsqrt.pop %v267
        %v276 = vrsqrt.pop %v268
        %v277 = vrsqrt.pop %v269
        %v278 = vrsqrt.pop %v270
        %v279 = vrsqrt.pop %v271
        %v280 = vrsqrt.pop %v272
        %v281 = vrsqrt.pop %v273
        %v282 = vmul.f32 %v226, %v274
        %v283 = vmul.f32 %v227, %v275
        %v284 = vmul.f32 %v228, %v276
        %v285 = vmul.f32 %v229, %v277
        %v286 = vmul.f32 %v230, %v278
        %v287 = vmul.f32 %v231, %v279
        %v288 = vmul.f32 %v232, %v280
        %v289 = vmul.f32 %v233, %v281
        %v290 = vld [vmem:[%s1] sm:$0x1]
        %v292 = vlaneseq
        %v293 = vshrl.u32 %v292, 7
        %v294 = vsub.s32 0, %v293
        %v295 = vrot.slane %v290, %v294
        %v297 = vmul.f32 %v282, %v295
        %v298 = vmul.f32 %v283, %v295
        %v299 = vmul.f32 %v284, %v295
        %v300 = vmul.f32 %v285, %v295
        %v301 = vmul.f32 %v286, %v295
        %v302 = vmul.f32 %v287, %v295
        %v303 = vmul.f32 %v288, %v295
        %v304 = vmul.f32 %v289, %v295
        %v305 = vld [vmem:[%s2] sm:$0x1]
        %v307 = vlaneseq
        %v308 = vshrl.u32 %v307, 7
        %v309 = vsub.s32 0, %v308
        %v310 = vrot.slane %v305, %v309
        %v312 = vadd.f32 %v297, %v310
        %v313 = vadd.f32 %v298, %v310
        %v314 = vadd.f32 %v299, %v310
        %v315 = vadd.f32 %v300, %v310
        %v316 = vadd.f32 %v301, %v310
        %v317 = vadd.f32 %v302, %v310
        %v318 = vadd.f32 %v303, %v310
        %v319 = vadd.f32 %v304, %v310
        %328 = vrot.lane.b32.xlu0 %v312, 96
        %v329 = vpop.permute.xlu0 %328
        %330 = vrot.lane.b32.xlu0 %v313, 96
        %v331 = vpop.permute.xlu0 %330
        %332 = vrot.lane.b32.xlu0 %v314, 96
        %v333 = vpop.permute.xlu0 %332
        %334 = vrot.lane.b32.xlu0 %v315, 96
        %v335 = vpop.permute.xlu0 %334
        %336 = vrot.lane.b32.xlu0 %v316, 96
        %v337 = vpop.permute.xlu0 %336
        %338 = vrot.lane.b32.xlu0 %v317, 96
        %v339 = vpop.permute.xlu0 %338
        %340 = vrot.lane.b32.xlu0 %v318, 96
        %v341 = vpop.permute.xlu0 %340
        %342 = vrot.lane.b32.xlu0 %v319, 96
        %v343 = vpop.permute.xlu0 %342
        %352 = vrot.lane.b32.xlu0 %v312, 64
        %v353 = vpop.permute.xlu0 %352
        %354 = vrot.lane.b32.xlu0 %v313, 64
        %v355 = vpop.permute.xlu0 %354
        %356 = vrot.lane.b32.xlu0 %v314, 64
        %v357 = vpop.permute.xlu0 %356
        %358 = vrot.lane.b32.xlu0 %v315, 64
        %v359 = vpop.permute.xlu0 %358
        %360 = vrot.lane.b32.xlu0 %v316, 64
        %v361 = vpop.permute.xlu0 %360
        %362 = vrot.lane.b32.xlu0 %v317, 64
        %v363 = vpop.permute.xlu0 %362
        %364 = vrot.lane.b32.xlu0 %v318, 64
        %v365 = vpop.permute.xlu0 %364
        %366 = vrot.lane.b32.xlu0 %v319, 64
        %v367 = vpop.permute.xlu0 %366
        %376 = vrot.lane.b32.xlu0 %v312, 32
        %v377 = vpop.permute.xlu0 %376
        %378 = vrot.lane.b32.xlu0 %v313, 32
        %v379 = vpop.permute.xlu0 %378
        %380 = vrot.lane.b32.xlu0 %v314, 32
        %v381 = vpop.permute.xlu0 %380
        %382 = vrot.lane.b32.xlu0 %v315, 32
        %v383 = vpop.permute.xlu0 %382
        %384 = vrot.lane.b32.xlu0 %v316, 32
        %v385 = vpop.permute.xlu0 %384
        %386 = vrot.lane.b32.xlu0 %v317, 32
        %v387 = vpop.permute.xlu0 %386
        %388 = vrot.lane.b32.xlu0 %v318, 32
        %v389 = vpop.permute.xlu0 %388
        %390 = vrot.lane.b32.xlu0 %v319, 32
        %v391 = vpop.permute.xlu0 %390
        %v400 = vpack.c.bf16 %v313, %v312
        %v401 = vpack.c.bf16 %v315, %v314
        %v402 = vpack.c.bf16 %v317, %v316
        %v403 = vpack.c.bf16 %v319, %v318
        %v404 = vpack.c.bf16 %v331, %v329
        %v405 = vpack.c.bf16 %v335, %v333
        %v406 = vpack.c.bf16 %v339, %v337
        %v407 = vpack.c.bf16 %v343, %v341
        %v408 = vpack.c.bf16 %v355, %v353
        %v409 = vpack.c.bf16 %v359, %v357
        %v410 = vpack.c.bf16 %v363, %v361
        %v411 = vpack.c.bf16 %v367, %v365
        %v412 = vpack.c.bf16 %v379, %v377
        %v413 = vpack.c.bf16 %v383, %v381
        %v414 = vpack.c.bf16 %v387, %v385
        %v415 = vpack.c.bf16 %v391, %v389
        %v416 = vmul.f32 %v312, 0.17677669
        %v417 = vmul.f32 %v313, 0.17677669
        %v418 = vmul.f32 %v314, 0.17677669
        %v419 = vmul.f32 %v315, 0.17677669
        %v420 = vmul.f32 %v316, 0.17677669
        %v421 = vmul.f32 %v317, 0.17677669
        %v422 = vmul.f32 %v318, 0.17677669
        %v423 = vmul.f32 %v319, 0.17677669
        %v424 = vmul.f32 %v329, 0.17677669
        %v425 = vmul.f32 %v331, 0.17677669
        %v426 = vmul.f32 %v333, 0.17677669
        %v427 = vmul.f32 %v335, 0.17677669
        %v428 = vmul.f32 %v337, 0.17677669
        %v429 = vmul.f32 %v339, 0.17677669
        %v430 = vmul.f32 %v341, 0.17677669
        %v431 = vmul.f32 %v343, 0.17677669
        %v432 = vmul.f32 %v353, 0.17677669
        %v433 = vmul.f32 %v355, 0.17677669
        %v434 = vmul.f32 %v357, 0.17677669
        %v435 = vmul.f32 %v359, 0.17677669
        %v436 = vmul.f32 %v361, 0.17677669
        %v437 = vmul.f32 %v363, 0.17677669
        %v438 = vmul.f32 %v365, 0.17677669
        %v439 = vmul.f32 %v367, 0.17677669
        %v440 = vmul.f32 %v377, 0.17677669
        %v441 = vmul.f32 %v379, 0.17677669
        %v442 = vmul.f32 %v381, 0.17677669
        %v443 = vmul.f32 %v383, 0.17677669
        %v444 = vmul.f32 %v385, 0.17677669
        %v445 = vmul.f32 %v387, 0.17677669
        %v446 = vmul.f32 %v389, 0.17677669
        %v447 = vmul.f32 %v391, 0.17677669
        %v448 = vpack.c.bf16 %v417, %v416
        %v449 = vpack.c.bf16 %v419, %v418
        %v450 = vpack.c.bf16 %v421, %v420
        %v451 = vpack.c.bf16 %v423, %v422
        %v452 = vpack.c.bf16 %v425, %v424
        %v453 = vpack.c.bf16 %v427, %v426
        %v454 = vpack.c.bf16 %v429, %v428
        %v455 = vpack.c.bf16 %v431, %v430
        %v456 = vpack.c.bf16 %v433, %v432
        %v457 = vpack.c.bf16 %v435, %v434
        %v458 = vpack.c.bf16 %v437, %v436
        %v459 = vpack.c.bf16 %v439, %v438
        %v460 = vpack.c.bf16 %v441, %v440
        %v461 = vpack.c.bf16 %v443, %v442
        %v462 = vpack.c.bf16 %v445, %v444
        %v463 = vpack.c.bf16 %v447, %v446
        %vm464 = vcmask 261120
        %v466 = vsel %vm464, %v448, 0
        %v469 = vsel %vm464, %v400, 0
        %471 = vmatprep.subr.bf16.mxu0 0
        %472 = vmatpush1.bf16.xpose.msra.mxu0 0
        %473 = vmatprep.subr.bf16.mxu0 0
        %474 = vmatpush1.bf16.xpose.msra.mxu0 0
        %475 = vmatprep.subr.bf16.mxu0 0
        %476 = vmatpush1.bf16.xpose.msra.mxu0 0
        %477 = vmatprep.subr.bf16.mxu0 0
        %478 = vmatpush1.bf16.xpose.msra.mxu0 0
        %479 = vmatprep.subr.bf16.mxu0 0
        %480 = vmatpush1.bf16.xpose.msra.mxu0 0
        %481 = vmatprep.subr.bf16.mxu0 0
        %482 = vmatpush1.bf16.xpose.msra.mxu0 0
        %483 = vmatprep.subr.bf16.mxu0 0
        %484 = vmatpush1.bf16.xpose.msra.mxu0 0
        %485 = vmatprep.subr.bf16.mxu0 0
        %486 = vmatpush1.bf16.xpose.msra.mxu0 %v469
        %487 = vmatprep.subr.bf16.mxu0 0
        %488 = vmatpush2.bf16.xpose.msra.mxu0 0
        %489 = vmatprep.subr.bf16.mxu0 0
        %490 = vmatpush2.bf16.xpose.msra.mxu0 0
        %491 = vmatprep.subr.bf16.mxu0 0
        %492 = vmatpush2.bf16.xpose.msra.mxu0 0
        %493 = vmatprep.subr.bf16.mxu0 0
        %494 = vmatpush2.bf16.xpose.msra.mxu0 0
        %495 = vmatprep.subr.bf16.mxu0 0
        %496 = vmatpush2.bf16.xpose.msra.mxu0 0
        %497 = vmatprep.subr.bf16.mxu0 0
        %498 = vmatpush2.bf16.xpose.msra.mxu0 0
        %499 = vmatprep.subr.bf16.mxu0 0
        %500 = vmatpush2.bf16.xpose.msra.mxu0 0
        %501 = vmatprep.subr.bf16.mxu0 0
        %502 = vmatpush2.bf16.xpose.msra.mxu0 0
        %503 = vmatprep.mubr.bf16.mxu0 0
        %504 = vmatmul.mubr.bf16.gmra.mxu0 %v466
        %v505 = vpop.f32.mrf.mxu0
        %v506 = vadd.f32 0.0, %v505
        %v507 = vpop.f32.mrf.mxu0
        %v508 = vpop.f32.mrf.mxu0
        %v509 = vadd.f32 0.0, %v508
        %v510 = vpop.f32.mrf.mxu0
        %511 = vdwg.mxu0
        %v513 = vsel %vm464, %v449, 0
        %v516 = vsel %vm464, %v401, 0
        %518 = vmatprep.subr.bf16.mxu0 0
        %519 = vmatpush1.bf16.xpose.msra.mxu0 0
        %520 = vmatprep.subr.bf16.mxu0 0
        %521 = vmatpush1.bf16.xpose.msra.mxu0 0
        %522 = vmatprep.subr.bf16.mxu0 0
        %523 = vmatpush1.bf16.xpose.msra.mxu0 0
        %524 = vmatprep.subr.bf16.mxu0 0
        %525 = vmatpush1.bf16.xpose.msra.mxu0 0
        %526 = vmatprep.subr.bf16.mxu0 0
        %527 = vmatpush1.bf16.xpose.msra.mxu0 0
        %528 = vmatprep.subr.bf16.mxu0 0
        %529 = vmatpush1.bf16.xpose.msra.mxu0 0
        %530 = vmatprep.subr.bf16.mxu0 0
        %531 = vmatpush1.bf16.xpose.msra.mxu0 0
        %532 = vmatprep.subr.bf16.mxu0 0
        %533 = vmatpush1.bf16.xpose.msra.mxu0 %v516
        %534 = vmatprep.subr.bf16.mxu0 0
        %535 = vmatpush2.bf16.xpose.msra.mxu0 0
        %536 = vmatprep.subr.bf16.mxu0 0
        %537 = vmatpush2.bf16.xpose.msra.mxu0 0
        %538 = vmatprep.subr.bf16.mxu0 0
        %539 = vmatpush2.bf16.xpose.msra.mxu0 0
        %540 = vmatprep.subr.bf16.mxu0 0
        %541 = vmatpush2.bf16.xpose.msra.mxu0 0
        %542 = vmatprep.subr.bf16.mxu0 0
        %543 = vmatpush2.bf16.xpose.msra.mxu0 0
        %544 = vmatprep.subr.bf16.mxu0 0
        %545 = vmatpush2.bf16.xpose.msra.mxu0 0
        %546 = vmatprep.subr.bf16.mxu0 0
        %547 = vmatpush2.bf16.xpose.msra.mxu0 0
        %548 = vmatprep.subr.bf16.mxu0 0
        %549 = vmatpush2.bf16.xpose.msra.mxu0 0
        %550 = vmatprep.mubr.bf16.mxu0 0
        %551 = vmatmul.mubr.bf16.gmra.mxu0 %v513
        %v552 = vpop.f32.mrf.mxu0
        %v553 = vadd.f32 0.0, %v552
        %v554 = vpop.f32.mrf.mxu0
        %v555 = vpop.f32.mrf.mxu0
        %v556 = vadd.f32 0.0, %v555
        %v557 = vpop.f32.mrf.mxu0
        %558 = vdwg.mxu0
        %v560 = vsel %vm464, %v450, 0
        %v563 = vsel %vm464, %v402, 0
        %565 = vmatprep.subr.bf16.mxu0 0
        %566 = vmatpush1.bf16.xpose.msra.mxu0 0
        %567 = vmatprep.subr.bf16.mxu0 0
        %568 = vmatpush1.bf16.xpose.msra.mxu0 0
        %569 = vmatprep.subr.bf16.mxu0 0
        %570 = vmatpush1.bf16.xpose.msra.mxu0 0
        %571 = vmatprep.subr.bf16.mxu0 0
        %572 = vmatpush1.bf16.xpose.msra.mxu0 0
        %573 = vmatprep.subr.bf16.mxu0 0
        %574 = vmatpush1.bf16.xpose.msra.mxu0 0
        %575 = vmatprep.subr.bf16.mxu0 0
        %576 = vmatpush1.bf16.xpose.msra.mxu0 0
        %577 = vmatprep.subr.bf16.mxu0 0
        %578 = vmatpush1.bf16.xpose.msra.mxu0 0
        %579 = vmatprep.subr.bf16.mxu0 0
        %580 = vmatpush1.bf16.xpose.msra.mxu0 %v563
        %581 = vmatprep.subr.bf16.mxu0 0
        %582 = vmatpush2.bf16.xpose.msra.mxu0 0
        %583 = vmatprep.subr.bf16.mxu0 0
        %584 = vmatpush2.bf16.xpose.msra.mxu0 0
        %585 = vmatprep.subr.bf16.mxu0 0
        %586 = vmatpush2.bf16.xpose.msra.mxu0 0
        %587 = vmatprep.subr.bf16.mxu0 0
        %588 = vmatpush2.bf16.xpose.msra.mxu0 0
        %589 = vmatprep.subr.bf16.mxu0 0
        %590 = vmatpush2.bf16.xpose.msra.mxu0 0
        %591 = vmatprep.subr.bf16.mxu0 0
        %592 = vmatpush2.bf16.xpose.msra.mxu0 0
        %593 = vmatprep.subr.bf16.mxu0 0
        %594 = vmatpush2.bf16.xpose.msra.mxu0 0
        %595 = vmatprep.subr.bf16.mxu0 0
        %596 = vmatpush2.bf16.xpose.msra.mxu0 0
        %597 = vmatprep.mubr.bf16.mxu0 0
        %598 = vmatmul.mubr.bf16.gmra.mxu0 %v560
        %v599 = vpop.f32.mrf.mxu0
        %v600 = vadd.f32 0.0, %v599
        %v601 = vpop.f32.mrf.mxu0
        %v602 = vpop.f32.mrf.mxu0
        %v603 = vadd.f32 0.0, %v602
        %v604 = vpop.f32.mrf.mxu0
        %605 = vdwg.mxu0
        %v607 = vsel %vm464, %v451, 0
        %v610 = vsel %vm464, %v403, 0
        %612 = vmatprep.subr.bf16.mxu0 0
        %613 = vmatpush1.bf16.xpose.msra.mxu0 0
        %614 = vmatprep.subr.bf16.mxu0 0
        %615 = vmatpush1.bf16.xpose.msra.mxu0 0
        %616 = vmatprep.subr.bf16.mxu0 0
        %617 = vmatpush1.bf16.xpose.msra.mxu0 0
        %618 = vmatprep.subr.bf16.mxu0 0
        %619 = vmatpush1.bf16.xpose.msra.mxu0 0
        %620 = vmatprep.subr.bf16.mxu0 0
        %621 = vmatpush1.bf16.xpose.msra.mxu0 0
        %622 = vmatprep.subr.bf16.mxu0 0
        %623 = vmatpush1.bf16.xpose.msra.mxu0 0
        %624 = vmatprep.subr.bf16.mxu0 0
        %625 = vmatpush1.bf16.xpose.msra.mxu0 0
        %626 = vmatprep.subr.bf16.mxu0 0
        %627 = vmatpush1.bf16.xpose.msra.mxu0 %v610
        %628 = vmatprep.subr.bf16.mxu0 0
        %629 = vmatpush2.bf16.xpose.msra.mxu0 0
        %630 = vmatprep.subr.bf16.mxu0 0
        %631 = vmatpush2.bf16.xpose.msra.mxu0 0
        %632 = vmatprep.subr.bf16.mxu0 0
        %633 = vmatpush2.bf16.xpose.msra.mxu0 0
        %634 = vmatprep.subr.bf16.mxu0 0
        %635 = vmatpush2.bf16.xpose.msra.mxu0 0
        %636 = vmatprep.subr.bf16.mxu0 0
        %637 = vmatpush2.bf16.xpose.msra.mxu0 0
        %638 = vmatprep.subr.bf16.mxu0 0
        %639 = vmatpush2.bf16.xpose.msra.mxu0 0
        %640 = vmatprep.subr.bf16.mxu0 0
        %641 = vmatpush2.bf16.xpose.msra.mxu0 0
        %642 = vmatprep.subr.bf16.mxu0 0
        %643 = vmatpush2.bf16.xpose.msra.mxu0 0
        %644 = vmatprep.mubr.bf16.mxu0 0
        %645 = vmatmul.mubr.bf16.gmra.mxu0 %v607
        %v646 = vpop.f32.mrf.mxu0
        %v647 = vadd.f32 0.0, %v646
        %v648 = vpop.f32.mrf.mxu0
        %v649 = vpop.f32.mrf.mxu0
        %v650 = vadd.f32 0.0, %v649
        %v651 = vpop.f32.mrf.mxu0
        %652 = vdwg.mxu0
        %v654 = vsel %vm464, %v452, 0
        %v657 = vsel %vm464, %v404, 0
        %659 = vmatprep.subr.bf16.mxu0 0
        %660 = vmatpush1.bf16.xpose.msra.mxu0 0
        %661 = vmatprep.subr.bf16.mxu0 0
        %662 = vmatpush1.bf16.xpose.msra.mxu0 0
        %663 = vmatprep.subr.bf16.mxu0 0
        %664 = vmatpush1.bf16.xpose.msra.mxu0 0
        %665 = vmatprep.subr.bf16.mxu0 0
        %666 = vmatpush1.bf16.xpose.msra.mxu0 0
        %667 = vmatprep.subr.bf16.mxu0 0
        %668 = vmatpush1.bf16.xpose.msra.mxu0 0
        %669 = vmatprep.subr.bf16.mxu0 0
        %670 = vmatpush1.bf16.xpose.msra.mxu0 0
        %671 = vmatprep.subr.bf16.mxu0 0
        %672 = vmatpush1.bf16.xpose.msra.mxu0 0
        %673 = vmatprep.subr.bf16.mxu0 0
        %674 = vmatpush1.bf16.xpose.msra.mxu0 %v657
        %675 = vmatprep.subr.bf16.mxu0 0
        %676 = vmatpush2.bf16.xpose.msra.mxu0 0
        %677 = vmatprep.subr.bf16.mxu0 0
        %678 = vmatpush2.bf16.xpose.msra.mxu0 0
        %679 = vmatprep.subr.bf16.mxu0 0
        %680 = vmatpush2.bf16.xpose.msra.mxu0 0
        %681 = vmatprep.subr.bf16.mxu0 0
        %682 = vmatpush2.bf16.xpose.msra.mxu0 0
        %683 = vmatprep.subr.bf16.mxu0 0
        %684 = vmatpush2.bf16.xpose.msra.mxu0 0
        %685 = vmatprep.subr.bf16.mxu0 0
        %686 = vmatpush2.bf16.xpose.msra.mxu0 0
        %687 = vmatprep.subr.bf16.mxu0 0
        %688 = vmatpush2.bf16.xpose.msra.mxu0 0
        %689 = vmatprep.subr.bf16.mxu0 0
        %690 = vmatpush2.bf16.xpose.msra.mxu0 0
        %691 = vmatprep.mubr.bf16.mxu0 0
        %692 = vmatmul.mubr.bf16.gmra.mxu0 %v654
        %v693 = vpop.f32.mrf.mxu0
        %v694 = vadd.f32 0.0, %v693
        %v695 = vpop.f32.mrf.mxu0
        %v696 = vpop.f32.mrf.mxu0
        %v697 = vadd.f32 0.0, %v696
        %v698 = vpop.f32.mrf.mxu0
        %699 = vdwg.mxu0
        %v701 = vsel %vm464, %v453, 0
        %v704 = vsel %vm464, %v405, 0
        %706 = vmatprep.subr.bf16.mxu0 0
        %707 = vmatpush1.bf16.xpose.msra.mxu0 0
        %708 = vmatprep.subr.bf16.mxu0 0
        %709 = vmatpush1.bf16.xpose.msra.mxu0 0
        %710 = vmatprep.subr.bf16.mxu0 0
        %711 = vmatpush1.bf16.xpose.msra.mxu0 0
        %712 = vmatprep.subr.bf16.mxu0 0
        %713 = vmatpush1.bf16.xpose.msra.mxu0 0
        %714 = vmatprep.subr.bf16.mxu0 0
        %715 = vmatpush1.bf16.xpose.msra.mxu0 0
        %716 = vmatprep.subr.bf16.mxu0 0
        %717 = vmatpush1.bf16.xpose.msra.mxu0 0
        %718 = vmatprep.subr.bf16.mxu0 0
        %719 = vmatpush1.bf16.xpose.msra.mxu0 0
        %720 = vmatprep.subr.bf16.mxu0 0
        %721 = vmatpush1.bf16.xpose.msra.mxu0 %v704
        %722 = vmatprep.subr.bf16.mxu0 0
        %723 = vmatpush2.bf16.xpose.msra.mxu0 0
        %724 = vmatprep.subr.bf16.mxu0 0
        %725 = vmatpush2.bf16.xpose.msra.mxu0 0
        %726 = vmatprep.subr.bf16.mxu0 0
        %727 = vmatpush2.bf16.xpose.msra.mxu0 0
        %728 = vmatprep.subr.bf16.mxu0 0
        %729 = vmatpush2.bf16.xpose.msra.mxu0 0
        %730 = vmatprep.subr.bf16.mxu0 0
        %731 = vmatpush2.bf16.xpose.msra.mxu0 0
        %732 = vmatprep.subr.bf16.mxu0 0
        %733 = vmatpush2.bf16.xpose.msra.mxu0 0
        %734 = vmatprep.subr.bf16.mxu0 0
        %735 = vmatpush2.bf16.xpose.msra.mxu0 0
        %736 = vmatprep.subr.bf16.mxu0 0
        %737 = vmatpush2.bf16.xpose.msra.mxu0 0
        %738 = vmatprep.mubr.bf16.mxu0 0
        %739 = vmatmul.mubr.bf16.gmra.mxu0 %v701
        %v740 = vpop.f32.mrf.mxu0
        %v741 = vadd.f32 0.0, %v740
        %v742 = vpop.f32.mrf.mxu0
        %v743 = vpop.f32.mrf.mxu0
        %v744 = vadd.f32 0.0, %v743
        %v745 = vpop.f32.mrf.mxu0
        %746 = vdwg.mxu0
        %v748 = vsel %vm464, %v454, 0
        %v751 = vsel %vm464, %v406, 0
        %753 = vmatprep.subr.bf16.mxu0 0
        %754 = vmatpush1.bf16.xpose.msra.mxu0 0
        %755 = vmatprep.subr.bf16.mxu0 0
        %756 = vmatpush1.bf16.xpose.msra.mxu0 0
        %757 = vmatprep.subr.bf16.mxu0 0
        %758 = vmatpush1.bf16.xpose.msra.mxu0 0
        %759 = vmatprep.subr.bf16.mxu0 0
        %760 = vmatpush1.bf16.xpose.msra.mxu0 0
        %761 = vmatprep.subr.bf16.mxu0 0
        %762 = vmatpush1.bf16.xpose.msra.mxu0 0
        %763 = vmatprep.subr.bf16.mxu0 0
        %764 = vmatpush1.bf16.xpose.msra.mxu0 0
        %765 = vmatprep.subr.bf16.mxu0 0
        %766 = vmatpush1.bf16.xpose.msra.mxu0 0
        %767 = vmatprep.subr.bf16.mxu0 0
        %768 = vmatpush1.bf16.xpose.msra.mxu0 %v751
        %769 = vmatprep.subr.bf16.mxu0 0
        %770 = vmatpush2.bf16.xpose.msra.mxu0 0
        %771 = vmatprep.subr.bf16.mxu0 0
        %772 = vmatpush2.bf16.xpose.msra.mxu0 0
        %773 = vmatprep.subr.bf16.mxu0 0
        %774 = vmatpush2.bf16.xpose.msra.mxu0 0
        %775 = vmatprep.subr.bf16.mxu0 0
        %776 = vmatpush2.bf16.xpose.msra.mxu0 0
        %777 = vmatprep.subr.bf16.mxu0 0
        %778 = vmatpush2.bf16.xpose.msra.mxu0 0
        %779 = vmatprep.subr.bf16.mxu0 0
        %780 = vmatpush2.bf16.xpose.msra.mxu0 0
        %781 = vmatprep.subr.bf16.mxu0 0
        %782 = vmatpush2.bf16.xpose.msra.mxu0 0
        %783 = vmatprep.subr.bf16.mxu0 0
        %784 = vmatpush2.bf16.xpose.msra.mxu0 0
        %785 = vmatprep.mubr.bf16.mxu0 0
        %786 = vmatmul.mubr.bf16.gmra.mxu0 %v748
        %v787 = vpop.f32.mrf.mxu0
        %v788 = vadd.f32 0.0, %v787
        %v789 = vpop.f32.mrf.mxu0
        %v790 = vpop.f32.mrf.mxu0
        %v791 = vadd.f32 0.0, %v790
        %v792 = vpop.f32.mrf.mxu0
        %793 = vdwg.mxu0
        %v795 = vsel %vm464, %v455, 0
        %v798 = vsel %vm464, %v407, 0
        %800 = vmatprep.subr.bf16.mxu0 0
        %801 = vmatpush1.bf16.xpose.msra.mxu0 0
        %802 = vmatprep.subr.bf16.mxu0 0
        %803 = vmatpush1.bf16.xpose.msra.mxu0 0
        %804 = vmatprep.subr.bf16.mxu0 0
        %805 = vmatpush1.bf16.xpose.msra.mxu0 0
        %806 = vmatprep.subr.bf16.mxu0 0
        %807 = vmatpush1.bf16.xpose.msra.mxu0 0
        %808 = vmatprep.subr.bf16.mxu0 0
        %809 = vmatpush1.bf16.xpose.msra.mxu0 0
        %810 = vmatprep.subr.bf16.mxu0 0
        %811 = vmatpush1.bf16.xpose.msra.mxu0 0
        %812 = vmatprep.subr.bf16.mxu0 0
        %813 = vmatpush1.bf16.xpose.msra.mxu0 0
        %814 = vmatprep.subr.bf16.mxu0 0
        %815 = vmatpush1.bf16.xpose.msra.mxu0 %v798
        %816 = vmatprep.subr.bf16.mxu0 0
        %817 = vmatpush2.bf16.xpose.msra.mxu0 0
        %818 = vmatprep.subr.bf16.mxu0 0
        %819 = vmatpush2.bf16.xpose.msra.mxu0 0
        %820 = vmatprep.subr.bf16.mxu0 0
        %821 = vmatpush2.bf16.xpose.msra.mxu0 0
        %822 = vmatprep.subr.bf16.mxu0 0
        %823 = vmatpush2.bf16.xpose.msra.mxu0 0
        %824 = vmatprep.subr.bf16.mxu0 0
        %825 = vmatpush2.bf16.xpose.msra.mxu0 0
        %826 = vmatprep.subr.bf16.mxu0 0
        %827 = vmatpush2.bf16.xpose.msra.mxu0 0
        %828 = vmatprep.subr.bf16.mxu0 0
        %829 = vmatpush2.bf16.xpose.msra.mxu0 0
        %830 = vmatprep.subr.bf16.mxu0 0
        %831 = vmatpush2.bf16.xpose.msra.mxu0 0
        %832 = vmatprep.mubr.bf16.mxu0 0
        %833 = vmatmul.mubr.bf16.gmra.mxu0 %v795
        %v834 = vpop.f32.mrf.mxu0
        %v835 = vadd.f32 0.0, %v834
        %v836 = vpop.f32.mrf.mxu0
        %v837 = vpop.f32.mrf.mxu0
        %v838 = vadd.f32 0.0, %v837
        %v839 = vpop.f32.mrf.mxu0
        %840 = vdwg.mxu0
        %v842 = vsel %vm464, %v456, 0
        %v845 = vsel %vm464, %v408, 0
        %847 = vmatprep.subr.bf16.mxu0 0
        %848 = vmatpush1.bf16.xpose.msra.mxu0 0
        %849 = vmatprep.subr.bf16.mxu0 0
        %850 = vmatpush1.bf16.xpose.msra.mxu0 0
        %851 = vmatprep.subr.bf16.mxu0 0
        %852 = vmatpush1.bf16.xpose.msra.mxu0 0
        %853 = vmatprep.subr.bf16.mxu0 0
        %854 = vmatpush1.bf16.xpose.msra.mxu0 0
        %855 = vmatprep.subr.bf16.mxu0 0
        %856 = vmatpush1.bf16.xpose.msra.mxu0 0
        %857 = vmatprep.subr.bf16.mxu0 0
        %858 = vmatpush1.bf16.xpose.msra.mxu0 0
        %859 = vmatprep.subr.bf16.mxu0 0
        %860 = vmatpush1.bf16.xpose.msra.mxu0 0
        %861 = vmatprep.subr.bf16.mxu0 0
        %862 = vmatpush1.bf16.xpose.msra.mxu0 %v845
        %863 = vmatprep.subr.bf16.mxu0 0
        %864 = vmatpush2.bf16.xpose.msra.mxu0 0
        %865 = vmatprep.subr.bf16.mxu0 0
        %866 = vmatpush2.bf16.xpose.msra.mxu0 0
        %867 = vmatprep.subr.bf16.mxu0 0
        %868 = vmatpush2.bf16.xpose.msra.mxu0 0
        %869 = vmatprep.subr.bf16.mxu0 0
        %870 = vmatpush2.bf16.xpose.msra.mxu0 0
        %871 = vmatprep.subr.bf16.mxu0 0
        %872 = vmatpush2.bf16.xpose.msra.mxu0 0
        %873 = vmatprep.subr.bf16.mxu0 0
        %874 = vmatpush2.bf16.xpose.msra.mxu0 0
        %875 = vmatprep.subr.bf16.mxu0 0
        %876 = vmatpush2.bf16.xpose.msra.mxu0 0
        %877 = vmatprep.subr.bf16.mxu0 0
        %878 = vmatpush2.bf16.xpose.msra.mxu0 0
        %879 = vmatprep.mubr.bf16.mxu0 0
        %880 = vmatmul.mubr.bf16.gmra.mxu0 %v842
        %v881 = vpop.f32.mrf.mxu0
        %v882 = vadd.f32 0.0, %v881
        %v883 = vpop.f32.mrf.mxu0
        %v884 = vpop.f32.mrf.mxu0
        %v885 = vadd.f32 0.0, %v884
        %v886 = vpop.f32.mrf.mxu0
        %887 = vdwg.mxu0
        %v889 = vsel %vm464, %v457, 0
        %v892 = vsel %vm464, %v409, 0
        %894 = vmatprep.subr.bf16.mxu0 0
        %895 = vmatpush1.bf16.xpose.msra.mxu0 0
        %896 = vmatprep.subr.bf16.mxu0 0
        %897 = vmatpush1.bf16.xpose.msra.mxu0 0
        %898 = vmatprep.subr.bf16.mxu0 0
        %899 = vmatpush1.bf16.xpose.msra.mxu0 0
        %900 = vmatprep.subr.bf16.mxu0 0
        %901 = vmatpush1.bf16.xpose.msra.mxu0 0
        %902 = vmatprep.subr.bf16.mxu0 0
        %903 = vmatpush1.bf16.xpose.msra.mxu0 0
        %904 = vmatprep.subr.bf16.mxu0 0
        %905 = vmatpush1.bf16.xpose.msra.mxu0 0
        %906 = vmatprep.subr.bf16.mxu0 0
        %907 = vmatpush1.bf16.xpose.msra.mxu0 0
        %908 = vmatprep.subr.bf16.mxu0 0
        %909 = vmatpush1.bf16.xpose.msra.mxu0 %v892
        %910 = vmatprep.subr.bf16.mxu0 0
        %911 = vmatpush2.bf16.xpose.msra.mxu0 0
        %912 = vmatprep.subr.bf16.mxu0 0
        %913 = vmatpush2.bf16.xpose.msra.mxu0 0
        %914 = vmatprep.subr.bf16.mxu0 0
        %915 = vmatpush2.bf16.xpose.msra.mxu0 0
        %916 = vmatprep.subr.bf16.mxu0 0
        %917 = vmatpush2.bf16.xpose.msra.mxu0 0
        %918 = vmatprep.subr.bf16.mxu0 0
        %919 = vmatpush2.bf16.xpose.msra.mxu0 0
        %920 = vmatprep.subr.bf16.mxu0 0
        %921 = vmatpush2.bf16.xpose.msra.mxu0 0
        %922 = vmatprep.subr.bf16.mxu0 0
        %923 = vmatpush2.bf16.xpose.msra.mxu0 0
        %924 = vmatprep.subr.bf16.mxu0 0
        %925 = vmatpush2.bf16.xpose.msra.mxu0 0
        %926 = vmatprep.mubr.bf16.mxu0 0
        %927 = vmatmul.mubr.bf16.gmra.mxu0 %v889
        %v928 = vpop.f32.mrf.mxu0
        %v929 = vadd.f32 0.0, %v928
        %v930 = vpop.f32.mrf.mxu0
        %v931 = vpop.f32.mrf.mxu0
        %v932 = vadd.f32 0.0, %v931
        %v933 = vpop.f32.mrf.mxu0
        %934 = vdwg.mxu0
        %v936 = vsel %vm464, %v458, 0
        %v939 = vsel %vm464, %v410, 0
        %941 = vmatprep.subr.bf16.mxu0 0
        %942 = vmatpush1.bf16.xpose.msra.mxu0 0
        %943 = vmatprep.subr.bf16.mxu0 0
        %944 = vmatpush1.bf16.xpose.msra.mxu0 0
        %945 = vmatprep.subr.bf16.mxu0 0
        %946 = vmatpush1.bf16.xpose.msra.mxu0 0
        %947 = vmatprep.subr.bf16.mxu0 0
        %948 = vmatpush1.bf16.xpose.msra.mxu0 0
        %949 = vmatprep.subr.bf16.mxu0 0
        %950 = vmatpush1.bf16.xpose.msra.mxu0 0
        %951 = vmatprep.subr.bf16.mxu0 0
        %952 = vmatpush1.bf16.xpose.msra.mxu0 0
        %953 = vmatprep.subr.bf16.mxu0 0
        %954 = vmatpush1.bf16.xpose.msra.mxu0 0
        %955 = vmatprep.subr.bf16.mxu0 0
        %956 = vmatpush1.bf16.xpose.msra.mxu0 %v939
        %957 = vmatprep.subr.bf16.mxu0 0
        %958 = vmatpush2.bf16.xpose.msra.mxu0 0
        %959 = vmatprep.subr.bf16.mxu0 0
        %960 = vmatpush2.bf16.xpose.msra.mxu0 0
        %961 = vmatprep.subr.bf16.mxu0 0
        %962 = vmatpush2.bf16.xpose.msra.mxu0 0
        %963 = vmatprep.subr.bf16.mxu0 0
        %964 = vmatpush2.bf16.xpose.msra.mxu0 0
        %965 = vmatprep.subr.bf16.mxu0 0
        %966 = vmatpush2.bf16.xpose.msra.mxu0 0
        %967 = vmatprep.subr.bf16.mxu0 0
        %968 = vmatpush2.bf16.xpose.msra.mxu0 0
        %969 = vmatprep.subr.bf16.mxu0 0
        %970 = vmatpush2.bf16.xpose.msra.mxu0 0
        %971 = vmatprep.subr.bf16.mxu0 0
        %972 = vmatpush2.bf16.xpose.msra.mxu0 0
        %973 = vmatprep.mubr.bf16.mxu0 0
        %974 = vmatmul.mubr.bf16.gmra.mxu0 %v936
        %v975 = vpop.f32.mrf.mxu0
        %v976 = vadd.f32 0.0, %v975
        %v977 = vpop.f32.mrf.mxu0
        %v978 = vpop.f32.mrf.mxu0
        %v979 = vadd.f32 0.0, %v978
        %v980 = vpop.f32.mrf.mxu0
        %981 = vdwg.mxu0
        %v983 = vsel %vm464, %v459, 0
        %v986 = vsel %vm464, %v411, 0
        %988 = vmatprep.subr.bf16.mxu0 0
        %989 = vmatpush1.bf16.xpose.msra.mxu0 0
        %990 = vmatprep.subr.bf16.mxu0 0
        %991 = vmatpush1.bf16.xpose.msra.mxu0 0
        %992 = vmatprep.subr.bf16.mxu0 0
        %993 = vmatpush1.bf16.xpose.msra.mxu0 0
        %994 = vmatprep.subr.bf16.mxu0 0
        %995 = vmatpush1.bf16.xpose.msra.mxu0 0
        %996 = vmatprep.subr.bf16.mxu0 0
        %997 = vmatpush1.bf16.xpose.msra.mxu0 0
        %998 = vmatprep.subr.bf16.mxu0 0
        %999 = vmatpush1.bf16.xpose.msra.mxu0 0
        %1000 = vmatprep.subr.bf16.mxu0 0
        %1001 = vmatpush1.bf16.xpose.msra.mxu0 0
        %1002 = vmatprep.subr.bf16.mxu0 0
        %1003 = vmatpush1.bf16.xpose.msra.mxu0 %v986
        %1004 = vmatprep.subr.bf16.mxu0 0
        %1005 = vmatpush2.bf16.xpose.msra.mxu0 0
        %1006 = vmatprep.subr.bf16.mxu0 0
        %1007 = vmatpush2.bf16.xpose.msra.mxu0 0
        %1008 = vmatprep.subr.bf16.mxu0 0
        %1009 = vmatpush2.bf16.xpose.msra.mxu0 0
        %1010 = vmatprep.subr.bf16.mxu0 0
        %1011 = vmatpush2.bf16.xpose.msra.mxu0 0
        %1012 = vmatprep.subr.bf16.mxu0 0
        %1013 = vmatpush2.bf16.xpose.msra.mxu0 0
        %1014 = vmatprep.subr.bf16.mxu0 0
        %1015 = vmatpush2.bf16.xpose.msra.mxu0 0
        %1016 = vmatprep.subr.bf16.mxu0 0
        %1017 = vmatpush2.bf16.xpose.msra.mxu0 0
        %1018 = vmatprep.subr.bf16.mxu0 0
        %1019 = vmatpush2.bf16.xpose.msra.mxu0 0
        %1020 = vmatprep.mubr.bf16.mxu0 0
        %1021 = vmatmul.mubr.bf16.gmra.mxu0 %v983
        %v1022 = vpop.f32.mrf.mxu0
        %v1023 = vadd.f32 0.0, %v1022
        %v1024 = vpop.f32.mrf.mxu0
        %v1025 = vpop.f32.mrf.mxu0
        %v1026 = vadd.f32 0.0, %v1025
        %v1027 = vpop.f32.mrf.mxu0
        %1028 = vdwg.mxu0
        %v1030 = vsel %vm464, %v460, 0
        %v1033 = vsel %vm464, %v412, 0
        %1035 = vmatprep.subr.bf16.mxu0 0
        %1036 = vmatpush1.bf16.xpose.msra.mxu0 0
        %1037 = vmatprep.subr.bf16.mxu0 0
        %1038 = vmatpush1.bf16.xpose.msra.mxu0 0
        %1039 = vmatprep.subr.bf16.mxu0 0
        %1040 = vmatpush1.bf16.xpose.msra.mxu0 0
        %1041 = vmatprep.subr.bf16.mxu0 0
        %1042 = vmatpush1.bf16.xpose.msra.mxu0 0
        %1043 = vmatprep.subr.bf16.mxu0 0
        %1044 = vmatpush1.bf16.xpose.msra.mxu0 0
        %1045 = vmatprep.subr.bf16.mxu0 0
        %1046 = vmatpush1.bf16.xpose.msra.mxu0 0
        %1047 = vmatprep.subr.bf16.mxu0 0
        %1048 = vmatpush1.bf16.xpose.msra.mxu0 0
        %1049 = vmatprep.subr.bf16.mxu0 0
        %1050 = vmatpush1.bf16.xpose.msra.mxu0 %v1033
        %1051 = vmatprep.subr.bf16.mxu0 0
        %1052 = vmatpush2.bf16.xpose.msra.mxu0 0
        %1053 = vmatprep.subr.bf16.mxu0 0
        %1054 = vmatpush2.bf16.xpose.msra.mxu0 0
        %1055 = vmatprep.subr.bf16.mxu0 0
        %1056 = vmatpush2.bf16.xpose.msra.mxu0 0
        %1057 = vmatprep.subr.bf16.mxu0 0
        %1058 = vmatpush2.bf16.xpose.msra.mxu0 0
        %1059 = vmatprep.subr.bf16.mxu0 0
        %1060 = vmatpush2.bf16.xpose.msra.mxu0 0
        %1061 = vmatprep.subr.bf16.mxu0 0
        %1062 = vmatpush2.bf16.xpose.msra.mxu0 0
        %1063 = vmatprep.subr.bf16.mxu0 0
        %1064 = vmatpush2.bf16.xpose.msra.mxu0 0
        %1065 = vmatprep.subr.bf16.mxu0 0
        %1066 = vmatpush2.bf16.xpose.msra.mxu0 0
        %1067 = vmatprep.mubr.bf16.mxu0 0
        %1068 = vmatmul.mubr.bf16.gmra.mxu0 %v1030
        %v1069 = vpop.f32.mrf.mxu0
        %v1070 = vadd.f32 0.0, %v1069
        %v1071 = vpop.f32.mrf.mxu0
        %v1072 = vpop.f32.mrf.mxu0
        %v1073 = vadd.f32 0.0, %v1072
        %v1074 = vpop.f32.mrf.mxu0
        %1075 = vdwg.mxu0
        %v1077 = vsel %vm464, %v461, 0
        %v1080 = vsel %vm464, %v413, 0
        %1082 = vmatprep.subr.bf16.mxu0 0
        %1083 = vmatpush1.bf16.xpose.msra.mxu0 0
        %1084 = vmatprep.subr.bf16.mxu0 0
        %1085 = vmatpush1.bf16.xpose.msra.mxu0 0
        %1086 = vmatprep.subr.bf16.mxu0 0
        %1087 = vmatpush1.bf16.xpose.msra.mxu0 0
        %1088 = vmatprep.subr.bf16.mxu0 0
        %1089 = vmatpush1.bf16.xpose.msra.mxu0 0
        %1090 = vmatprep.subr.bf16.mxu0 0
        %1091 = vmatpush1.bf16.xpose.msra.mxu0 0
        %1092 = vmatprep.subr.bf16.mxu0 0
        %1093 = vmatpush1.bf16.xpose.msra.mxu0 0
        %1094 = vmatprep.subr.bf16.mxu0 0
        %1095 = vmatpush1.bf16.xpose.msra.mxu0 0
        %1096 = vmatprep.subr.bf16.mxu0 0
        %1097 = vmatpush1.bf16.xpose.msra.mxu0 %v1080
        %1098 = vmatprep.subr.bf16.mxu0 0
        %1099 = vmatpush2.bf16.xpose.msra.mxu0 0
        %1100 = vmatprep.subr.bf16.mxu0 0
        %1101 = vmatpush2.bf16.xpose.msra.mxu0 0
        %1102 = vmatprep.subr.bf16.mxu0 0
        %1103 = vmatpush2.bf16.xpose.msra.mxu0 0
        %1104 = vmatprep.subr.bf16.mxu0 0
        %1105 = vmatpush2.bf16.xpose.msra.mxu0 0
        %1106 = vmatprep.subr.bf16.mxu0 0
        %1107 = vmatpush2.bf16.xpose.msra.mxu0 0
        %1108 = vmatprep.subr.bf16.mxu0 0
        %1109 = vmatpush2.bf16.xpose.msra.mxu0 0
        %1110 = vmatprep.subr.bf16.mxu0 0
        %1111 = vmatpush2.bf16.xpose.msra.mxu0 0
        %1112 = vmatprep.subr.bf16.mxu0 0
        %1113 = vmatpush2.bf16.xpose.msra.mxu0 0
        %1114 = vmatprep.mubr.bf16.mxu0 0
        %1115 = vmatmul.mubr.bf16.gmra.mxu0 %v1077
        %v1116 = vpop.f32.mrf.mxu0
        %v1117 = vadd.f32 0.0, %v1116
        %v1118 = vpop.f32.mrf.mxu0
        %v1119 = vpop.f32.mrf.mxu0
        %v1120 = vadd.f32 0.0, %v1119
        %v1121 = vpop.f32.mrf.mxu0
        %1122 = vdwg.mxu0
        %v1124 = vsel %vm464, %v462, 0
        %v1127 = vsel %vm464, %v414, 0
        %1129 = vmatprep.subr.bf16.mxu0 0
        %1130 = vmatpush1.bf16.xpose.msra.mxu0 0
        %1131 = vmatprep.subr.bf16.mxu0 0
        %1132 = vmatpush1.bf16.xpose.msra.mxu0 0
        %1133 = vmatprep.subr.bf16.mxu0 0
        %1134 = vmatpush1.bf16.xpose.msra.mxu0 0
        %1135 = vmatprep.subr.bf16.mxu0 0
        %1136 = vmatpush1.bf16.xpose.msra.mxu0 0
        %1137 = vmatprep.subr.bf16.mxu0 0
        %1138 = vmatpush1.bf16.xpose.msra.mxu0 0
        %1139 = vmatprep.subr.bf16.mxu0 0
        %1140 = vmatpush1.bf16.xpose.msra.mxu0 0
        %1141 = vmatprep.subr.bf16.mxu0 0
        %1142 = vmatpush1.bf16.xpose.msra.mxu0 0
        %1143 = vmatprep.subr.bf16.mxu0 0
        %1144 = vmatpush1.bf16.xpose.msra.mxu0 %v1127
        %1145 = vmatprep.subr.bf16.mxu0 0
        %1146 = vmatpush2.bf16.xpose.msra.mxu0 0
        %1147 = vmatprep.subr.bf16.mxu0 0
        %1148 = vmatpush2.bf16.xpose.msra.mxu0 0
        %1149 = vmatprep.subr.bf16.mxu0 0
        %1150 = vmatpush2.bf16.xpose.msra.mxu0 0
        %1151 = vmatprep.subr.bf16.mxu0 0
        %1152 = vmatpush2.bf16.xpose.msra.mxu0 0
        %1153 = vmatprep.subr.bf16.mxu0 0
        %1154 = vmatpush2.bf16.xpose.msra.mxu0 0
        %1155 = vmatprep.subr.bf16.mxu0 0
        %1156 = vmatpush2.bf16.xpose.msra.mxu0 0
        %1157 = vmatprep.subr.bf16.mxu0 0
        %1158 = vmatpush2.bf16.xpose.msra.mxu0 0
        %1159 = vmatprep.subr.bf16.mxu0 0
        %1160 = vmatpush2.bf16.xpose.msra.mxu0 0
        %1161 = vmatprep.mubr.bf16.mxu0 0
        %1162 = vmatmul.mubr.bf16.gmra.mxu0 %v1124
        %v1163 = vpop.f32.mrf.mxu0
        %v1164 = vadd.f32 0.0, %v1163
        %v1165 = vpop.f32.mrf.mxu0
        %v1166 = vpop.f32.mrf.mxu0
        %v1167 = vadd.f32 0.0, %v1166
        %v1168 = vpop.f32.mrf.mxu0
        %1169 = vdwg.mxu0
        %v1171 = vsel %vm464, %v463, 0
        %v1174 = vsel %vm464, %v415, 0
        %1176 = vmatprep.subr.bf16.mxu0 0
        %1177 = vmatpush1.bf16.xpose.msra.mxu0 0
        %1178 = vmatprep.subr.bf16.mxu0 0
        %1179 = vmatpush1.bf16.xpose.msra.mxu0 0
        %1180 = vmatprep.subr.bf16.mxu0 0
        %1181 = vmatpush1.bf16.xpose.msra.mxu0 0
        %1182 = vmatprep.subr.bf16.mxu0 0
        %1183 = vmatpush1.bf16.xpose.msra.mxu0 0
        %1184 = vmatprep.subr.bf16.mxu0 0
        %1185 = vmatpush1.bf16.xpose.msra.mxu0 0
        %1186 = vmatprep.subr.bf16.mxu0 0
        %1187 = vmatpush1.bf16.xpose.msra.mxu0 0
        %1188 = vmatprep.subr.bf16.mxu0 0
        %1189 = vmatpush1.bf16.xpose.msra.mxu0 0
        %1190 = vmatprep.subr.bf16.mxu0 0
        %1191 = vmatpush1.bf16.xpose.msra.mxu0 %v1174
        %1192 = vmatprep.subr.bf16.mxu0 0
        %1193 = vmatpush2.bf16.xpose.msra.mxu0 0
        %1194 = vmatprep.subr.bf16.mxu0 0
        %1195 = vmatpush2.bf16.xpose.msra.mxu0 0
        %1196 = vmatprep.subr.bf16.mxu0 0
        %1197 = vmatpush2.bf16.xpose.msra.mxu0 0
        %1198 = vmatprep.subr.bf16.mxu0 0
        %1199 = vmatpush2.bf16.xpose.msra.mxu0 0
        %1200 = vmatprep.subr.bf16.mxu0 0
        %1201 = vmatpush2.bf16.xpose.msra.mxu0 0
        %1202 = vmatprep.subr.bf16.mxu0 0
        %1203 = vmatpush2.bf16.xpose.msra.mxu0 0
        %1204 = vmatprep.subr.bf16.mxu0 0
        %1205 = vmatpush2.bf16.xpose.msra.mxu0 0
        %1206 = vmatprep.subr.bf16.mxu0 0
        %1207 = vmatpush2.bf16.xpose.msra.mxu0 0
        %1208 = vmatprep.mubr.bf16.mxu0 0
        %1209 = vmatmul.mubr.bf16.gmra.mxu0 %v1171
        %v1210 = vpop.f32.mrf.mxu0
        %v1211 = vadd.f32 0.0, %v1210
        %v1212 = vpop.f32.mrf.mxu0
        %v1213 = vpop.f32.mrf.mxu0
        %v1214 = vadd.f32 0.0, %v1213
        %v1215 = vpop.f32.mrf.mxu0
        %1216 = vdwg.mxu0
        %vm1217 = vcmask 130048
        %v1218 = vsel %vm1217, %v506, -inf
        %1219 = vmax.xlane.f32.xlu0 %v1218
        %v1220 = vpop.xlane.xlu0 %1219
        %v1221 = vsel %vm1217, %v509, -inf
        %1222 = vmax.xlane.f32.xlu0 %v1221
        %v1223 = vpop.xlane.xlu0 %1222
        %v1224 = vsel %vm1217, %v553, -inf
        %1225 = vmax.xlane.f32.xlu0 %v1224
        %v1226 = vpop.xlane.xlu0 %1225
        %v1227 = vsel %vm1217, %v556, -inf
        %1228 = vmax.xlane.f32.xlu0 %v1227
        %v1229 = vpop.xlane.xlu0 %1228
        %v1230 = vsel %vm1217, %v600, -inf
        %1231 = vmax.xlane.f32.xlu0 %v1230
        %v1232 = vpop.xlane.xlu0 %1231
        %v1233 = vsel %vm1217, %v603, -inf
        %1234 = vmax.xlane.f32.xlu0 %v1233
        %v1235 = vpop.xlane.xlu0 %1234
        %v1236 = vsel %vm1217, %v647, -inf
        %1237 = vmax.xlane.f32.xlu0 %v1236
        %v1238 = vpop.xlane.xlu0 %1237
        %v1239 = vsel %vm1217, %v650, -inf
        %1240 = vmax.xlane.f32.xlu0 %v1239
        %v1241 = vpop.xlane.xlu0 %1240
        %v1242 = vsel %vm1217, %v694, -inf
        %1243 = vmax.xlane.f32.xlu0 %v1242
        %v1244 = vpop.xlane.xlu0 %1243
        %v1245 = vsel %vm1217, %v697, -inf
        %1246 = vmax.xlane.f32.xlu0 %v1245
        %v1247 = vpop.xlane.xlu0 %1246
        %v1248 = vsel %vm1217, %v741, -inf
        %1249 = vmax.xlane.f32.xlu0 %v1248
        %v1250 = vpop.xlane.xlu0 %1249
        %v1251 = vsel %vm1217, %v744, -inf
        %1252 = vmax.xlane.f32.xlu0 %v1251
        %v1253 = vpop.xlane.xlu0 %1252
        %v1254 = vsel %vm1217, %v788, -inf
        %1255 = vmax.xlane.f32.xlu0 %v1254
        %v1256 = vpop.xlane.xlu0 %1255
        %v1257 = vsel %vm1217, %v791, -inf
        %1258 = vmax.xlane.f32.xlu0 %v1257
        %v1259 = vpop.xlane.xlu0 %1258
        %v1260 = vsel %vm1217, %v835, -inf
        %1261 = vmax.xlane.f32.xlu0 %v1260
        %v1262 = vpop.xlane.xlu0 %1261
        %v1263 = vsel %vm1217, %v838, -inf
        %1264 = vmax.xlane.f32.xlu0 %v1263
        %v1265 = vpop.xlane.xlu0 %1264
        %v1266 = vsel %vm1217, %v882, -inf
        %1267 = vmax.xlane.f32.xlu0 %v1266
        %v1268 = vpop.xlane.xlu0 %1267
        %v1269 = vsel %vm1217, %v885, -inf
        %1270 = vmax.xlane.f32.xlu0 %v1269
        %v1271 = vpop.xlane.xlu0 %1270
        %v1272 = vsel %vm1217, %v929, -inf
        %1273 = vmax.xlane.f32.xlu0 %v1272
        %v1274 = vpop.xlane.xlu0 %1273
        %v1275 = vsel %vm1217, %v932, -inf
        %1276 = vmax.xlane.f32.xlu0 %v1275
        %v1277 = vpop.xlane.xlu0 %1276
        %v1278 = vsel %vm1217, %v976, -inf
        %1279 = vmax.xlane.f32.xlu0 %v1278
        %v1280 = vpop.xlane.xlu0 %1279
        %v1281 = vsel %vm1217, %v979, -inf
        %1282 = vmax.xlane.f32.xlu0 %v1281
        %v1283 = vpop.xlane.xlu0 %1282
        %v1284 = vsel %vm1217, %v1023, -inf
        %1285 = vmax.xlane.f32.xlu0 %v1284
        %v1286 = vpop.xlane.xlu0 %1285
        %v1287 = vsel %vm1217, %v1026, -inf
        %1288 = vmax.xlane.f32.xlu0 %v1287
        %v1289 = vpop.xlane.xlu0 %1288
        %v1290 = vsel %vm1217, %v1070, -inf
        %1291 = vmax.xlane.f32.xlu0 %v1290
        %v1292 = vpop.xlane.xlu0 %1291
        %v1293 = vsel %vm1217, %v1073, -inf
        %1294 = vmax.xlane.f32.xlu0 %v1293
        %v1295 = vpop.xlane.xlu0 %1294
        %v1296 = vsel %vm1217, %v1117, -inf
        %1297 = vmax.xlane.f32.xlu0 %v1296
        %v1298 = vpop.xlane.xlu0 %1297
        %v1299 = vsel %vm1217, %v1120, -inf
        %1300 = vmax.xlane.f32.xlu0 %v1299
        %v1301 = vpop.xlane.xlu0 %1300
        %v1302 = vsel %vm1217, %v1164, -inf
        %1303 = vmax.xlane.f32.xlu0 %v1302
        %v1304 = vpop.xlane.xlu0 %1303
        %v1305 = vsel %vm1217, %v1167, -inf
        %1306 = vmax.xlane.f32.xlu0 %v1305
        %v1307 = vpop.xlane.xlu0 %1306
        %v1308 = vsel %vm1217, %v1211, -inf
        %1309 = vmax.xlane.f32.xlu0 %v1308
        %v1310 = vpop.xlane.xlu0 %1309
        %v1311 = vsel %vm1217, %v1214, -inf
        %1312 = vmax.xlane.f32.xlu0 %v1311
        %v1313 = vpop.xlane.xlu0 %1312
        %v1314 = vsub.f32 %v506, %v1220
        %v1315 = vsub.f32 %v509, %v1223
        %v1316 = vsub.f32 %v553, %v1226
        %v1317 = vsub.f32 %v556, %v1229
        %v1318 = vsub.f32 %v600, %v1232
        %v1319 = vsub.f32 %v603, %v1235
        %v1320 = vsub.f32 %v647, %v1238
        %v1321 = vsub.f32 %v650, %v1241
        %v1322 = vsub.f32 %v694, %v1244
        %v1323 = vsub.f32 %v697, %v1247
        %v1324 = vsub.f32 %v741, %v1250
        %v1325 = vsub.f32 %v744, %v1253
        %v1326 = vsub.f32 %v788, %v1256
        %v1327 = vsub.f32 %v791, %v1259
        %v1328 = vsub.f32 %v835, %v1262
        %v1329 = vsub.f32 %v838, %v1265
        %v1330 = vsub.f32 %v882, %v1268
        %v1331 = vsub.f32 %v885, %v1271
        %v1332 = vsub.f32 %v929, %v1274
        %v1333 = vsub.f32 %v932, %v1277
        %v1334 = vsub.f32 %v976, %v1280
        %v1335 = vsub.f32 %v979, %v1283
        %v1336 = vsub.f32 %v1023, %v1286
        %v1337 = vsub.f32 %v1026, %v1289
        %v1338 = vsub.f32 %v1070, %v1292
        %v1339 = vsub.f32 %v1073, %v1295
        %v1340 = vsub.f32 %v1117, %v1298
        %v1341 = vsub.f32 %v1120, %v1301
        %v1342 = vsub.f32 %v1164, %v1304
        %v1343 = vsub.f32 %v1167, %v1307
        %v1344 = vsub.f32 %v1211, %v1310
        %v1345 = vsub.f32 %v1214, %v1313
        %v1346 = vmul.f32 %v1314, 1.442695
        %v1347 = vpow.pop %v1346
        %v1348 = vmul.f32 %v1315, 1.442695
        %v1349 = vpow.pop %v1348
        %v1350 = vmul.f32 %v1316, 1.442695
        %v1351 = vpow.pop %v1350
        %v1352 = vmul.f32 %v1317, 1.442695
        %v1353 = vpow.pop %v1352
        %v1354 = vmul.f32 %v1318, 1.442695
        %v1355 = vpow.pop %v1354
        %v1356 = vmul.f32 %v1319, 1.442695
        %v1357 = vpow.pop %v1356
        %v1358 = vmul.f32 %v1320, 1.442695
        %v1359 = vpow.pop %v1358
        %v1360 = vmul.f32 %v1321, 1.442695
        %v1361 = vpow.pop %v1360
        %v1362 = vmul.f32 %v1322, 1.442695
        %v1363 = vpow.pop %v1362
        %v1364 = vmul.f32 %v1323, 1.442695
        %v1365 = vpow.pop %v1364
        %v1366 = vmul.f32 %v1324, 1.442695
        %v1367 = vpow.pop %v1366
        %v1368 = vmul.f32 %v1325, 1.442695
        %v1369 = vpow.pop %v1368
        %v1370 = vmul.f32 %v1326, 1.442695
        %v1371 = vpow.pop %v1370
        %v1372 = vmul.f32 %v1327, 1.442695
        %v1373 = vpow.pop %v1372
        %v1374 = vmul.f32 %v1328, 1.442695
        %v1375 = vpow.pop %v1374
        %v1376 = vmul.f32 %v1329, 1.442695
        %v1377 = vpow.pop %v1376
        %v1378 = vmul.f32 %v1330, 1.442695
        %v1379 = vpow.pop %v1378
        %v1380 = vmul.f32 %v1331, 1.442695
        %v1381 = vpow.pop %v1380
        %v1382 = vmul.f32 %v1332, 1.442695
        %v1383 = vpow.pop %v1382
        %v1384 = vmul.f32 %v1333, 1.442695
        %v1385 = vpow.pop %v1384
        %v1386 = vmul.f32 %v1334, 1.442695
        %v1387 = vpow.pop %v1386
        %v1388 = vmul.f32 %v1335, 1.442695
        %v1389 = vpow.pop %v1388
        %v1390 = vmul.f32 %v1336, 1.442695
        %v1391 = vpow.pop %v1390
        %v1392 = vmul.f32 %v1337, 1.442695
        %v1393 = vpow.pop %v1392
        %v1394 = vmul.f32 %v1338, 1.442695
        %v1395 = vpow.pop %v1394
        %v1396 = vmul.f32 %v1339, 1.442695
        %v1397 = vpow.pop %v1396
        %v1398 = vmul.f32 %v1340, 1.442695
        %v1399 = vpow.pop %v1398
        %v1400 = vmul.f32 %v1341, 1.442695
        %v1401 = vpow.pop %v1400
        %v1402 = vmul.f32 %v1342, 1.442695
        %v1403 = vpow.pop %v1402
        %v1404 = vmul.f32 %v1343, 1.442695
        %v1405 = vpow.pop %v1404
        %v1406 = vmul.f32 %v1344, 1.442695
        %v1407 = vpow.pop %v1406
        %v1408 = vmul.f32 %v1345, 1.442695
        %v1409 = vpow.pop %v1408
        %v1410 = vsel %vm1217, %v1347, 0.0
        %1411 = vadd.xlane.f32.xlu0 %v1410
        %v1412 = vpop.xlane.xlu0 %1411
        %v1413 = vsel %vm1217, %v1349, 0.0
        %1414 = vadd.xlane.f32.xlu0 %v1413
        %v1415 = vpop.xlane.xlu0 %1414
        %v1416 = vsel %vm1217, %v1351, 0.0
        %1417 = vadd.xlane.f32.xlu0 %v1416
        %v1418 = vpop.xlane.xlu0 %1417
        %v1419 = vsel %vm1217, %v1353, 0.0
        %1420 = vadd.xlane.f32.xlu0 %v1419
        %v1421 = vpop.xlane.xlu0 %1420
        %v1422 = vsel %vm1217, %v1355, 0.0
        %1423 = vadd.xlane.f32.xlu0 %v1422
        %v1424 = vpop.xlane.xlu0 %1423
        %v1425 = vsel %vm1217, %v1357, 0.0
        %1426 = vadd.xlane.f32.xlu0 %v1425
        %v1427 = vpop.xlane.xlu0 %1426
        %v1428 = vsel %vm1217, %v1359, 0.0
        %1429 = vadd.xlane.f32.xlu0 %v1428
        %v1430 = vpop.xlane.xlu0 %1429
        %v1431 = vsel %vm1217, %v1361, 0.0
        %1432 = vadd.xlane.f32.xlu0 %v1431
        %v1433 = vpop.xlane.xlu0 %1432
        %v1434 = vsel %vm1217, %v1363, 0.0
        %1435 = vadd.xlane.f32.xlu0 %v1434
        %v1436 = vpop.xlane.xlu0 %1435
        %v1437 = vsel %vm1217, %v1365, 0.0
        %1438 = vadd.xlane.f32.xlu0 %v1437
        %v1439 = vpop.xlane.xlu0 %1438
        %v1440 = vsel %vm1217, %v1367, 0.0
        %1441 = vadd.xlane.f32.xlu0 %v1440
        %v1442 = vpop.xlane.xlu0 %1441
        %v1443 = vsel %vm1217, %v1369, 0.0
        %1444 = vadd.xlane.f32.xlu0 %v1443
        %v1445 = vpop.xlane.xlu0 %1444
        %v1446 = vsel %vm1217, %v1371, 0.0
        %1447 = vadd.xlane.f32.xlu0 %v1446
        %v1448 = vpop.xlane.xlu0 %1447
        %v1449 = vsel %vm1217, %v1373, 0.0
        %1450 = vadd.xlane.f32.xlu0 %v1449
        %v1451 = vpop.xlane.xlu0 %1450
        %v1452 = vsel %vm1217, %v1375, 0.0
        %1453 = vadd.xlane.f32.xlu0 %v1452
        %v1454 = vpop.xlane.xlu0 %1453
        %v1455 = vsel %vm1217, %v1377, 0.0
        %1456 = vadd.xlane.f32.xlu0 %v1455
        %v1457 = vpop.xlane.xlu0 %1456
        %v1458 = vsel %vm1217, %v1379, 0.0
        %1459 = vadd.xlane.f32.xlu0 %v1458
        %v1460 = vpop.xlane.xlu0 %1459
        %v1461 = vsel %vm1217, %v1381, 0.0
        %1462 = vadd.xlane.f32.xlu0 %v1461
        %v1463 = vpop.xlane.xlu0 %1462
        %v1464 = vsel %vm1217, %v1383, 0.0
        %1465 = vadd.xlane.f32.xlu0 %v1464
        %v1466 = vpop.xlane.xlu0 %1465
        %v1467 = vsel %vm1217, %v1385, 0.0
        %1468 = vadd.xlane.f32.xlu0 %v1467
        %v1469 = vpop.xlane.xlu0 %1468
        %v1470 = vsel %vm1217, %v1387, 0.0
        %1471 = vadd.xlane.f32.xlu0 %v1470
        %v1472 = vpop.xlane.xlu0 %1471
        %v1473 = vsel %vm1217, %v1389, 0.0
        %1474 = vadd.xlane.f32.xlu0 %v1473
        %v1475 = vpop.xlane.xlu0 %1474
        %v1476 = vsel %vm1217, %v1391, 0.0
        %1477 = vadd.xlane.f32.xlu0 %v1476
        %v1478 = vpop.xlane.xlu0 %1477
        %v1479 = vsel %vm1217, %v1393, 0.0
        %1480 = vadd.xlane.f32.xlu0 %v1479
        %v1481 = vpop.xlane.xlu0 %1480
        %v1482 = vsel %vm1217, %v1395, 0.0
        %1483 = vadd.xlane.f32.xlu0 %v1482
        %v1484 = vpop.xlane.xlu0 %1483
        %v1485 = vsel %vm1217, %v1397, 0.0
        %1486 = vadd.xlane.f32.xlu0 %v1485
        %v1487 = vpop.xlane.xlu0 %1486
        %v1488 = vsel %vm1217, %v1399, 0.0
        %1489 = vadd.xlane.f32.xlu0 %v1488
        %v1490 = vpop.xlane.xlu0 %1489
        %v1491 = vsel %vm1217, %v1401, 0.0
        %1492 = vadd.xlane.f32.xlu0 %v1491
        %v1493 = vpop.xlane.xlu0 %1492
        %v1494 = vsel %vm1217, %v1403, 0.0
        %1495 = vadd.xlane.f32.xlu0 %v1494
        %v1496 = vpop.xlane.xlu0 %1495
        %v1497 = vsel %vm1217, %v1405, 0.0
        %1498 = vadd.xlane.f32.xlu0 %v1497
        %v1499 = vpop.xlane.xlu0 %1498
        %v1500 = vsel %vm1217, %v1407, 0.0
        %1501 = vadd.xlane.f32.xlu0 %v1500
        %v1502 = vpop.xlane.xlu0 %1501
        %v1503 = vsel %vm1217, %v1409, 0.0
        %1504 = vadd.xlane.f32.xlu0 %v1503
        %v1505 = vpop.xlane.xlu0 %1504
        %v1506 = vpack.c.bf16 %v1349, %v1347
        %v1507 = vpack.c.bf16 %v1353, %v1351
        %v1508 = vpack.c.bf16 %v1357, %v1355
        %v1509 = vpack.c.bf16 %v1361, %v1359
        %v1510 = vpack.c.bf16 %v1365, %v1363
        %v1511 = vpack.c.bf16 %v1369, %v1367
        %v1512 = vpack.c.bf16 %v1373, %v1371
        %v1513 = vpack.c.bf16 %v1377, %v1375
        %v1514 = vpack.c.bf16 %v1381, %v1379
        %v1515 = vpack.c.bf16 %v1385, %v1383
        %v1516 = vpack.c.bf16 %v1389, %v1387
        %v1517 = vpack.c.bf16 %v1393, %v1391
        %v1518 = vpack.c.bf16 %v1397, %v1395
        %v1519 = vpack.c.bf16 %v1401, %v1399
        %v1520 = vpack.c.bf16 %v1405, %v1403
        %v1521 = vpack.c.bf16 %v1409, %v1407
        %v1523 = vsel %vm1217, %v1506, 0
        %1525 = vmatprep.subr.bf16.mxu0 0
        %1526 = vmatpush1.bf16.msra.mxu0 0
        %1527 = vmatprep.subr.bf16.mxu0 0
        %1528 = vmatpush1.bf16.msra.mxu0 0
        %1529 = vmatprep.subr.bf16.mxu0 0
        %1530 = vmatpush1.bf16.msra.mxu0 0
        %1531 = vmatprep.subr.bf16.mxu0 0
        %1532 = vmatpush1.bf16.msra.mxu0 0
        %1533 = vmatprep.subr.bf16.mxu0 0
        %1534 = vmatpush1.bf16.msra.mxu0 0
        %1535 = vmatprep.subr.bf16.mxu0 0
        %1536 = vmatpush1.bf16.msra.mxu0 0
        %1537 = vmatprep.subr.bf16.mxu0 0
        %1538 = vmatpush1.bf16.msra.mxu0 0
        %1539 = vmatprep.subr.bf16.mxu0 0
        %1540 = vmatpush1.bf16.msra.mxu0 %v400
        %1541 = vmatprep.subr.bf16.mxu0 0
        %1542 = vmatpush2.bf16.msra.mxu0 0
        %1543 = vmatprep.subr.bf16.mxu0 0
        %1544 = vmatpush2.bf16.msra.mxu0 0
        %1545 = vmatprep.subr.bf16.mxu0 0
        %1546 = vmatpush2.bf16.msra.mxu0 0
        %1547 = vmatprep.subr.bf16.mxu0 0
        %1548 = vmatpush2.bf16.msra.mxu0 0
        %1549 = vmatprep.subr.bf16.mxu0 0
        %1550 = vmatpush2.bf16.msra.mxu0 0
        %1551 = vmatprep.subr.bf16.mxu0 0
        %1552 = vmatpush2.bf16.msra.mxu0 0
        %1553 = vmatprep.subr.bf16.mxu0 0
        %1554 = vmatpush2.bf16.msra.mxu0 0
        %1555 = vmatprep.subr.bf16.mxu0 0
        %1556 = vmatpush2.bf16.msra.mxu0 0
        %1557 = vmatprep.mubr.bf16.mxu0 0
        %1558 = vmatmul.mubr.bf16.gmra.mxu0 %v1523
        %v1559 = vpop.f32.mrf.mxu0
        %v1560 = vadd.f32 0.0, %v1559
        %v1561 = vpop.f32.mrf.mxu0
        %v1562 = vpop.f32.mrf.mxu0
        %v1563 = vadd.f32 0.0, %v1562
        %v1564 = vpop.f32.mrf.mxu0
        %1565 = vdwg.mxu0
        %v1567 = vsel %vm1217, %v1507, 0
        %1569 = vmatprep.subr.bf16.mxu0 0
        %1570 = vmatpush1.bf16.msra.mxu0 0
        %1571 = vmatprep.subr.bf16.mxu0 0
        %1572 = vmatpush1.bf16.msra.mxu0 0
        %1573 = vmatprep.subr.bf16.mxu0 0
        %1574 = vmatpush1.bf16.msra.mxu0 0
        %1575 = vmatprep.subr.bf16.mxu0 0
        %1576 = vmatpush1.bf16.msra.mxu0 0
        %1577 = vmatprep.subr.bf16.mxu0 0
        %1578 = vmatpush1.bf16.msra.mxu0 0
        %1579 = vmatprep.subr.bf16.mxu0 0
        %1580 = vmatpush1.bf16.msra.mxu0 0
        %1581 = vmatprep.subr.bf16.mxu0 0
        %1582 = vmatpush1.bf16.msra.mxu0 0
        %1583 = vmatprep.subr.bf16.mxu0 0
        %1584 = vmatpush1.bf16.msra.mxu0 %v401
        %1585 = vmatprep.subr.bf16.mxu0 0
        %1586 = vmatpush2.bf16.msra.mxu0 0
        %1587 = vmatprep.subr.bf16.mxu0 0
        %1588 = vmatpush2.bf16.msra.mxu0 0
        %1589 = vmatprep.subr.bf16.mxu0 0
        %1590 = vmatpush2.bf16.msra.mxu0 0
        %1591 = vmatprep.subr.bf16.mxu0 0
        %1592 = vmatpush2.bf16.msra.mxu0 0
        %1593 = vmatprep.subr.bf16.mxu0 0
        %1594 = vmatpush2.bf16.msra.mxu0 0
        %1595 = vmatprep.subr.bf16.mxu0 0
        %1596 = vmatpush2.bf16.msra.mxu0 0
        %1597 = vmatprep.subr.bf16.mxu0 0
        %1598 = vmatpush2.bf16.msra.mxu0 0
        %1599 = vmatprep.subr.bf16.mxu0 0
        %1600 = vmatpush2.bf16.msra.mxu0 0
        %1601 = vmatprep.mubr.bf16.mxu0 0
        %1602 = vmatmul.mubr.bf16.gmra.mxu0 %v1567
        %v1603 = vpop.f32.mrf.mxu0
        %v1604 = vadd.f32 0.0, %v1603
        %v1605 = vpop.f32.mrf.mxu0
        %v1606 = vpop.f32.mrf.mxu0
        %v1607 = vadd.f32 0.0, %v1606
        %v1608 = vpop.f32.mrf.mxu0
        %1609 = vdwg.mxu0
        %v1611 = vsel %vm1217, %v1508, 0
        %1613 = vmatprep.subr.bf16.mxu0 0
        %1614 = vmatpush1.bf16.msra.mxu0 0
        %1615 = vmatprep.subr.bf16.mxu0 0
        %1616 = vmatpush1.bf16.msra.mxu0 0
        %1617 = vmatprep.subr.bf16.mxu0 0
        %1618 = vmatpush1.bf16.msra.mxu0 0
        %1619 = vmatprep.subr.bf16.mxu0 0
        %1620 = vmatpush1.bf16.msra.mxu0 0
        %1621 = vmatprep.subr.bf16.mxu0 0
        %1622 = vmatpush1.bf16.msra.mxu0 0
        %1623 = vmatprep.subr.bf16.mxu0 0
        %1624 = vmatpush1.bf16.msra.mxu0 0
        %1625 = vmatprep.subr.bf16.mxu0 0
        %1626 = vmatpush1.bf16.msra.mxu0 0
        %1627 = vmatprep.subr.bf16.mxu0 0
        %1628 = vmatpush1.bf16.msra.mxu0 %v402
        %1629 = vmatprep.subr.bf16.mxu0 0
        %1630 = vmatpush2.bf16.msra.mxu0 0
        %1631 = vmatprep.subr.bf16.mxu0 0
        %1632 = vmatpush2.bf16.msra.mxu0 0
        %1633 = vmatprep.subr.bf16.mxu0 0
        %1634 = vmatpush2.bf16.msra.mxu0 0
        %1635 = vmatprep.subr.bf16.mxu0 0
        %1636 = vmatpush2.bf16.msra.mxu0 0
        %1637 = vmatprep.subr.bf16.mxu0 0
        %1638 = vmatpush2.bf16.msra.mxu0 0
        %1639 = vmatprep.subr.bf16.mxu0 0
        %1640 = vmatpush2.bf16.msra.mxu0 0
        %1641 = vmatprep.subr.bf16.mxu0 0
        %1642 = vmatpush2.bf16.msra.mxu0 0
        %1643 = vmatprep.subr.bf16.mxu0 0
        %1644 = vmatpush2.bf16.msra.mxu0 0
        %1645 = vmatprep.mubr.bf16.mxu0 0
        %1646 = vmatmul.mubr.bf16.gmra.mxu0 %v1611
        %v1647 = vpop.f32.mrf.mxu0
        %v1648 = vadd.f32 0.0, %v1647
        %v1649 = vpop.f32.mrf.mxu0
        %v1650 = vpop.f32.mrf.mxu0
        %v1651 = vadd.f32 0.0, %v1650
        %v1652 = vpop.f32.mrf.mxu0
        %1653 = vdwg.mxu0
        %v1655 = vsel %vm1217, %v1509, 0
        %1657 = vmatprep.subr.bf16.mxu0 0
        %1658 = vmatpush1.bf16.msra.mxu0 0
        %1659 = vmatprep.subr.bf16.mxu0 0
        %1660 = vmatpush1.bf16.msra.mxu0 0
        %1661 = vmatprep.subr.bf16.mxu0 0
        %1662 = vmatpush1.bf16.msra.mxu0 0
        %1663 = vmatprep.subr.bf16.mxu0 0
        %1664 = vmatpush1.bf16.msra.mxu0 0
        %1665 = vmatprep.subr.bf16.mxu0 0
        %1666 = vmatpush1.bf16.msra.mxu0 0
        %1667 = vmatprep.subr.bf16.mxu0 0
        %1668 = vmatpush1.bf16.msra.mxu0 0
        %1669 = vmatprep.subr.bf16.mxu0 0
        %1670 = vmatpush1.bf16.msra.mxu0 0
        %1671 = vmatprep.subr.bf16.mxu0 0
        %1672 = vmatpush1.bf16.msra.mxu0 %v403
        %1673 = vmatprep.subr.bf16.mxu0 0
        %1674 = vmatpush2.bf16.msra.mxu0 0
        %1675 = vmatprep.subr.bf16.mxu0 0
        %1676 = vmatpush2.bf16.msra.mxu0 0
        %1677 = vmatprep.subr.bf16.mxu0 0
        %1678 = vmatpush2.bf16.msra.mxu0 0
        %1679 = vmatprep.subr.bf16.mxu0 0
        %1680 = vmatpush2.bf16.msra.mxu0 0
        %1681 = vmatprep.subr.bf16.mxu0 0
        %1682 = vmatpush2.bf16.msra.mxu0 0
        %1683 = vmatprep.subr.bf16.mxu0 0
        %1684 = vmatpush2.bf16.msra.mxu0 0
        %1685 = vmatprep.subr.bf16.mxu0 0
        %1686 = vmatpush2.bf16.msra.mxu0 0
        %1687 = vmatprep.subr.bf16.mxu0 0
        %1688 = vmatpush2.bf16.msra.mxu0 0
        %1689 = vmatprep.mubr.bf16.mxu0 0
        %1690 = vmatmul.mubr.bf16.gmra.mxu0 %v1655
        %v1691 = vpop.f32.mrf.mxu0
        %v1692 = vadd.f32 0.0, %v1691
        %v1693 = vpop.f32.mrf.mxu0
        %v1694 = vpop.f32.mrf.mxu0
        %v1695 = vadd.f32 0.0, %v1694
        %v1696 = vpop.f32.mrf.mxu0
        %1697 = vdwg.mxu0
        %v1699 = vsel %vm1217, %v1510, 0
        %1701 = vmatprep.subr.bf16.mxu0 0
        %1702 = vmatpush1.bf16.msra.mxu0 0
        %1703 = vmatprep.subr.bf16.mxu0 0
        %1704 = vmatpush1.bf16.msra.mxu0 0
        %1705 = vmatprep.subr.bf16.mxu0 0
        %1706 = vmatpush1.bf16.msra.mxu0 0
        %1707 = vmatprep.subr.bf16.mxu0 0
        %1708 = vmatpush1.bf16.msra.mxu0 0
        %1709 = vmatprep.subr.bf16.mxu0 0
        %1710 = vmatpush1.bf16.msra.mxu0 0
        %1711 = vmatprep.subr.bf16.mxu0 0
        %1712 = vmatpush1.bf16.msra.mxu0 0
        %1713 = vmatprep.subr.bf16.mxu0 0
        %1714 = vmatpush1.bf16.msra.mxu0 0
        %1715 = vmatprep.subr.bf16.mxu0 0
        %1716 = vmatpush1.bf16.msra.mxu0 %v404
        %1717 = vmatprep.subr.bf16.mxu0 0
        %1718 = vmatpush2.bf16.msra.mxu0 0
        %1719 = vmatprep.subr.bf16.mxu0 0
        %1720 = vmatpush2.bf16.msra.mxu0 0
        %1721 = vmatprep.subr.bf16.mxu0 0
        %1722 = vmatpush2.bf16.msra.mxu0 0
        %1723 = vmatprep.subr.bf16.mxu0 0
        %1724 = vmatpush2.bf16.msra.mxu0 0
        %1725 = vmatprep.subr.bf16.mxu0 0
        %1726 = vmatpush2.bf16.msra.mxu0 0
        %1727 = vmatprep.subr.bf16.mxu0 0
        %1728 = vmatpush2.bf16.msra.mxu0 0
        %1729 = vmatprep.subr.bf16.mxu0 0
        %1730 = vmatpush2.bf16.msra.mxu0 0
        %1731 = vmatprep.subr.bf16.mxu0 0
        %1732 = vmatpush2.bf16.msra.mxu0 0
        %1733 = vmatprep.mubr.bf16.mxu0 0
        %1734 = vmatmul.mubr.bf16.gmra.mxu0 %v1699
        %v1735 = vpop.f32.mrf.mxu0
        %v1736 = vadd.f32 0.0, %v1735
        %v1737 = vpop.f32.mrf.mxu0
        %v1738 = vpop.f32.mrf.mxu0
        %v1739 = vadd.f32 0.0, %v1738
        %v1740 = vpop.f32.mrf.mxu0
        %1741 = vdwg.mxu0
        %v1743 = vsel %vm1217, %v1511, 0
        %1745 = vmatprep.subr.bf16.mxu0 0
        %1746 = vmatpush1.bf16.msra.mxu0 0
        %1747 = vmatprep.subr.bf16.mxu0 0
        %1748 = vmatpush1.bf16.msra.mxu0 0
        %1749 = vmatprep.subr.bf16.mxu0 0
        %1750 = vmatpush1.bf16.msra.mxu0 0
        %1751 = vmatprep.subr.bf16.mxu0 0
        %1752 = vmatpush1.bf16.msra.mxu0 0
        %1753 = vmatprep.subr.bf16.mxu0 0
        %1754 = vmatpush1.bf16.msra.mxu0 0
        %1755 = vmatprep.subr.bf16.mxu0 0
        %1756 = vmatpush1.bf16.msra.mxu0 0
        %1757 = vmatprep.subr.bf16.mxu0 0
        %1758 = vmatpush1.bf16.msra.mxu0 0
        %1759 = vmatprep.subr.bf16.mxu0 0
        %1760 = vmatpush1.bf16.msra.mxu0 %v405
        %1761 = vmatprep.subr.bf16.mxu0 0
        %1762 = vmatpush2.bf16.msra.mxu0 0
        %1763 = vmatprep.subr.bf16.mxu0 0
        %1764 = vmatpush2.bf16.msra.mxu0 0
        %1765 = vmatprep.subr.bf16.mxu0 0
        %1766 = vmatpush2.bf16.msra.mxu0 0
        %1767 = vmatprep.subr.bf16.mxu0 0
        %1768 = vmatpush2.bf16.msra.mxu0 0
        %1769 = vmatprep.subr.bf16.mxu0 0
        %1770 = vmatpush2.bf16.msra.mxu0 0
        %1771 = vmatprep.subr.bf16.mxu0 0
        %1772 = vmatpush2.bf16.msra.mxu0 0
        %1773 = vmatprep.subr.bf16.mxu0 0
        %1774 = vmatpush2.bf16.msra.mxu0 0
        %1775 = vmatprep.subr.bf16.mxu0 0
        %1776 = vmatpush2.bf16.msra.mxu0 0
        %1777 = vmatprep.mubr.bf16.mxu0 0
        %1778 = vmatmul.mubr.bf16.gmra.mxu0 %v1743
        %v1779 = vpop.f32.mrf.mxu0
        %v1780 = vadd.f32 0.0, %v1779
        %v1781 = vpop.f32.mrf.mxu0
        %v1782 = vpop.f32.mrf.mxu0
        %v1783 = vadd.f32 0.0, %v1782
        %v1784 = vpop.f32.mrf.mxu0
        %1785 = vdwg.mxu0
        %v1787 = vsel %vm1217, %v1512, 0
        %1789 = vmatprep.subr.bf16.mxu0 0
        %1790 = vmatpush1.bf16.msra.mxu0 0
        %1791 = vmatprep.subr.bf16.mxu0 0
        %1792 = vmatpush1.bf16.msra.mxu0 0
        %1793 = vmatprep.subr.bf16.mxu0 0
        %1794 = vmatpush1.bf16.msra.mxu0 0
        %1795 = vmatprep.subr.bf16.mxu0 0
        %1796 = vmatpush1.bf16.msra.mxu0 0
        %1797 = vmatprep.subr.bf16.mxu0 0
        %1798 = vmatpush1.bf16.msra.mxu0 0
        %1799 = vmatprep.subr.bf16.mxu0 0
        %1800 = vmatpush1.bf16.msra.mxu0 0
        %1801 = vmatprep.subr.bf16.mxu0 0
        %1802 = vmatpush1.bf16.msra.mxu0 0
        %1803 = vmatprep.subr.bf16.mxu0 0
        %1804 = vmatpush1.bf16.msra.mxu0 %v406
        %1805 = vmatprep.subr.bf16.mxu0 0
        %1806 = vmatpush2.bf16.msra.mxu0 0
        %1807 = vmatprep.subr.bf16.mxu0 0
        %1808 = vmatpush2.bf16.msra.mxu0 0
        %1809 = vmatprep.subr.bf16.mxu0 0
        %1810 = vmatpush2.bf16.msra.mxu0 0
        %1811 = vmatprep.subr.bf16.mxu0 0
        %1812 = vmatpush2.bf16.msra.mxu0 0
        %1813 = vmatprep.subr.bf16.mxu0 0
        %1814 = vmatpush2.bf16.msra.mxu0 0
        %1815 = vmatprep.subr.bf16.mxu0 0
        %1816 = vmatpush2.bf16.msra.mxu0 0
        %1817 = vmatprep.subr.bf16.mxu0 0
        %1818 = vmatpush2.bf16.msra.mxu0 0
        %1819 = vmatprep.subr.bf16.mxu0 0
        %1820 = vmatpush2.bf16.msra.mxu0 0
        %1821 = vmatprep.mubr.bf16.mxu0 0
        %1822 = vmatmul.mubr.bf16.gmra.mxu0 %v1787
        %v1823 = vpop.f32.mrf.mxu0
        %v1824 = vadd.f32 0.0, %v1823
        %v1825 = vpop.f32.mrf.mxu0
        %v1826 = vpop.f32.mrf.mxu0
        %v1827 = vadd.f32 0.0, %v1826
        %v1828 = vpop.f32.mrf.mxu0
        %1829 = vdwg.mxu0
        %v1831 = vsel %vm1217, %v1513, 0
        %1833 = vmatprep.subr.bf16.mxu0 0
        %1834 = vmatpush1.bf16.msra.mxu0 0
        %1835 = vmatprep.subr.bf16.mxu0 0
        %1836 = vmatpush1.bf16.msra.mxu0 0
        %1837 = vmatprep.subr.bf16.mxu0 0
        %1838 = vmatpush1.bf16.msra.mxu0 0
        %1839 = vmatprep.subr.bf16.mxu0 0
        %1840 = vmatpush1.bf16.msra.mxu0 0
        %1841 = vmatprep.subr.bf16.mxu0 0
        %1842 = vmatpush1.bf16.msra.mxu0 0
        %1843 = vmatprep.subr.bf16.mxu0 0
        %1844 = vmatpush1.bf16.msra.mxu0 0
        %1845 = vmatprep.subr.bf16.mxu0 0
        %1846 = vmatpush1.bf16.msra.mxu0 0
        %1847 = vmatprep.subr.bf16.mxu0 0
        %1848 = vmatpush1.bf16.msra.mxu0 %v407
        %1849 = vmatprep.subr.bf16.mxu0 0
        %1850 = vmatpush2.bf16.msra.mxu0 0
        %1851 = vmatprep.subr.bf16.mxu0 0
        %1852 = vmatpush2.bf16.msra.mxu0 0
        %1853 = vmatprep.subr.bf16.mxu0 0
        %1854 = vmatpush2.bf16.msra.mxu0 0
        %1855 = vmatprep.subr.bf16.mxu0 0
        %1856 = vmatpush2.bf16.msra.mxu0 0
        %1857 = vmatprep.subr.bf16.mxu0 0
        %1858 = vmatpush2.bf16.msra.mxu0 0
        %1859 = vmatprep.subr.bf16.mxu0 0
        %1860 = vmatpush2.bf16.msra.mxu0 0
        %1861 = vmatprep.subr.bf16.mxu0 0
        %1862 = vmatpush2.bf16.msra.mxu0 0
        %1863 = vmatprep.subr.bf16.mxu0 0
        %1864 = vmatpush2.bf16.msra.mxu0 0
        %1865 = vmatprep.mubr.bf16.mxu0 0
        %1866 = vmatmul.mubr.bf16.gmra.mxu0 %v1831
        %v1867 = vpop.f32.mrf.mxu0
        %v1868 = vadd.f32 0.0, %v1867
        %v1869 = vpop.f32.mrf.mxu0
        %v1870 = vpop.f32.mrf.mxu0
        %v1871 = vadd.f32 0.0, %v1870
        %v1872 = vpop.f32.mrf.mxu0
        %1873 = vdwg.mxu0
        %v1875 = vsel %vm1217, %v1514, 0
        %1877 = vmatprep.subr.bf16.mxu0 0
        %1878 = vmatpush1.bf16.msra.mxu0 0
        %1879 = vmatprep.subr.bf16.mxu0 0
        %1880 = vmatpush1.bf16.msra.mxu0 0
        %1881 = vmatprep.subr.bf16.mxu0 0
        %1882 = vmatpush1.bf16.msra.mxu0 0
        %1883 = vmatprep.subr.bf16.mxu0 0
        %1884 = vmatpush1.bf16.msra.mxu0 0
        %1885 = vmatprep.subr.bf16.mxu0 0
        %1886 = vmatpush1.bf16.msra.mxu0 0
        %1887 = vmatprep.subr.bf16.mxu0 0
        %1888 = vmatpush1.bf16.msra.mxu0 0
        %1889 = vmatprep.subr.bf16.mxu0 0
        %1890 = vmatpush1.bf16.msra.mxu0 0
        %1891 = vmatprep.subr.bf16.mxu0 0
        %1892 = vmatpush1.bf16.msra.mxu0 %v408
        %1893 = vmatprep.subr.bf16.mxu0 0
        %1894 = vmatpush2.bf16.msra.mxu0 0
        %1895 = vmatprep.subr.bf16.mxu0 0
        %1896 = vmatpush2.bf16.msra.mxu0 0
        %1897 = vmatprep.subr.bf16.mxu0 0
        %1898 = vmatpush2.bf16.msra.mxu0 0
        %1899 = vmatprep.subr.bf16.mxu0 0
        %1900 = vmatpush2.bf16.msra.mxu0 0
        %1901 = vmatprep.subr.bf16.mxu0 0
        %1902 = vmatpush2.bf16.msra.mxu0 0
        %1903 = vmatprep.subr.bf16.mxu0 0
        %1904 = vmatpush2.bf16.msra.mxu0 0
        %1905 = vmatprep.subr.bf16.mxu0 0
        %1906 = vmatpush2.bf16.msra.mxu0 0
        %1907 = vmatprep.subr.bf16.mxu0 0
        %1908 = vmatpush2.bf16.msra.mxu0 0
        %1909 = vmatprep.mubr.bf16.mxu0 0
        %1910 = vmatmul.mubr.bf16.gmra.mxu0 %v1875
        %v1911 = vpop.f32.mrf.mxu0
        %v1912 = vadd.f32 0.0, %v1911
        %v1913 = vpop.f32.mrf.mxu0
        %v1914 = vpop.f32.mrf.mxu0
        %v1915 = vadd.f32 0.0, %v1914
        %v1916 = vpop.f32.mrf.mxu0
        %1917 = vdwg.mxu0
        %v1919 = vsel %vm1217, %v1515, 0
        %1921 = vmatprep.subr.bf16.mxu0 0
        %1922 = vmatpush1.bf16.msra.mxu0 0
        %1923 = vmatprep.subr.bf16.mxu0 0
        %1924 = vmatpush1.bf16.msra.mxu0 0
        %1925 = vmatprep.subr.bf16.mxu0 0
        %1926 = vmatpush1.bf16.msra.mxu0 0
        %1927 = vmatprep.subr.bf16.mxu0 0
        %1928 = vmatpush1.bf16.msra.mxu0 0
        %1929 = vmatprep.subr.bf16.mxu0 0
        %1930 = vmatpush1.bf16.msra.mxu0 0
        %1931 = vmatprep.subr.bf16.mxu0 0
        %1932 = vmatpush1.bf16.msra.mxu0 0
        %1933 = vmatprep.subr.bf16.mxu0 0
        %1934 = vmatpush1.bf16.msra.mxu0 0
        %1935 = vmatprep.subr.bf16.mxu0 0
        %1936 = vmatpush1.bf16.msra.mxu0 %v409
        %1937 = vmatprep.subr.bf16.mxu0 0
        %1938 = vmatpush2.bf16.msra.mxu0 0
        %1939 = vmatprep.subr.bf16.mxu0 0
        %1940 = vmatpush2.bf16.msra.mxu0 0
        %1941 = vmatprep.subr.bf16.mxu0 0
        %1942 = vmatpush2.bf16.msra.mxu0 0
        %1943 = vmatprep.subr.bf16.mxu0 0
        %1944 = vmatpush2.bf16.msra.mxu0 0
        %1945 = vmatprep.subr.bf16.mxu0 0
        %1946 = vmatpush2.bf16.msra.mxu0 0
        %1947 = vmatprep.subr.bf16.mxu0 0
        %1948 = vmatpush2.bf16.msra.mxu0 0
        %1949 = vmatprep.subr.bf16.mxu0 0
        %1950 = vmatpush2.bf16.msra.mxu0 0
        %1951 = vmatprep.subr.bf16.mxu0 0
        %1952 = vmatpush2.bf16.msra.mxu0 0
        %1953 = vmatprep.mubr.bf16.mxu0 0
        %1954 = vmatmul.mubr.bf16.gmra.mxu0 %v1919
        %v1955 = vpop.f32.mrf.mxu0
        %v1956 = vadd.f32 0.0, %v1955
        %v1957 = vpop.f32.mrf.mxu0
        %v1958 = vpop.f32.mrf.mxu0
        %v1959 = vadd.f32 0.0, %v1958
        %v1960 = vpop.f32.mrf.mxu0
        %1961 = vdwg.mxu0
        %v1963 = vsel %vm1217, %v1516, 0
        %1965 = vmatprep.subr.bf16.mxu0 0
        %1966 = vmatpush1.bf16.msra.mxu0 0
        %1967 = vmatprep.subr.bf16.mxu0 0
        %1968 = vmatpush1.bf16.msra.mxu0 0
        %1969 = vmatprep.subr.bf16.mxu0 0
        %1970 = vmatpush1.bf16.msra.mxu0 0
        %1971 = vmatprep.subr.bf16.mxu0 0
        %1972 = vmatpush1.bf16.msra.mxu0 0
        %1973 = vmatprep.subr.bf16.mxu0 0
        %1974 = vmatpush1.bf16.msra.mxu0 0
        %1975 = vmatprep.subr.bf16.mxu0 0
        %1976 = vmatpush1.bf16.msra.mxu0 0
        %1977 = vmatprep.subr.bf16.mxu0 0
        %1978 = vmatpush1.bf16.msra.mxu0 0
        %1979 = vmatprep.subr.bf16.mxu0 0
        %1980 = vmatpush1.bf16.msra.mxu0 %v410
        %1981 = vmatprep.subr.bf16.mxu0 0
        %1982 = vmatpush2.bf16.msra.mxu0 0
        %1983 = vmatprep.subr.bf16.mxu0 0
        %1984 = vmatpush2.bf16.msra.mxu0 0
        %1985 = vmatprep.subr.bf16.mxu0 0
        %1986 = vmatpush2.bf16.msra.mxu0 0
        %1987 = vmatprep.subr.bf16.mxu0 0
        %1988 = vmatpush2.bf16.msra.mxu0 0
        %1989 = vmatprep.subr.bf16.mxu0 0
        %1990 = vmatpush2.bf16.msra.mxu0 0
        %1991 = vmatprep.subr.bf16.mxu0 0
        %1992 = vmatpush2.bf16.msra.mxu0 0
        %1993 = vmatprep.subr.bf16.mxu0 0
        %1994 = vmatpush2.bf16.msra.mxu0 0
        %1995 = vmatprep.subr.bf16.mxu0 0
        %1996 = vmatpush2.bf16.msra.mxu0 0
        %1997 = vmatprep.mubr.bf16.mxu0 0
        %1998 = vmatmul.mubr.bf16.gmra.mxu0 %v1963
        %v1999 = vpop.f32.mrf.mxu0
        %v2000 = vadd.f32 0.0, %v1999
        %v2001 = vpop.f32.mrf.mxu0
        %v2002 = vpop.f32.mrf.mxu0
        %v2003 = vadd.f32 0.0, %v2002
        %v2004 = vpop.f32.mrf.mxu0
        %2005 = vdwg.mxu0
        %v2007 = vsel %vm1217, %v1517, 0
        %2009 = vmatprep.subr.bf16.mxu0 0
        %2010 = vmatpush1.bf16.msra.mxu0 0
        %2011 = vmatprep.subr.bf16.mxu0 0
        %2012 = vmatpush1.bf16.msra.mxu0 0
        %2013 = vmatprep.subr.bf16.mxu0 0
        %2014 = vmatpush1.bf16.msra.mxu0 0
        %2015 = vmatprep.subr.bf16.mxu0 0
        %2016 = vmatpush1.bf16.msra.mxu0 0
        %2017 = vmatprep.subr.bf16.mxu0 0
        %2018 = vmatpush1.bf16.msra.mxu0 0
        %2019 = vmatprep.subr.bf16.mxu0 0
        %2020 = vmatpush1.bf16.msra.mxu0 0
        %2021 = vmatprep.subr.bf16.mxu0 0
        %2022 = vmatpush1.bf16.msra.mxu0 0
        %2023 = vmatprep.subr.bf16.mxu0 0
        %2024 = vmatpush1.bf16.msra.mxu0 %v411
        %2025 = vmatprep.subr.bf16.mxu0 0
        %2026 = vmatpush2.bf16.msra.mxu0 0
        %2027 = vmatprep.subr.bf16.mxu0 0
        %2028 = vmatpush2.bf16.msra.mxu0 0
        %2029 = vmatprep.subr.bf16.mxu0 0
        %2030 = vmatpush2.bf16.msra.mxu0 0
        %2031 = vmatprep.subr.bf16.mxu0 0
        %2032 = vmatpush2.bf16.msra.mxu0 0
        %2033 = vmatprep.subr.bf16.mxu0 0
        %2034 = vmatpush2.bf16.msra.mxu0 0
        %2035 = vmatprep.subr.bf16.mxu0 0
        %2036 = vmatpush2.bf16.msra.mxu0 0
        %2037 = vmatprep.subr.bf16.mxu0 0
        %2038 = vmatpush2.bf16.msra.mxu0 0
        %2039 = vmatprep.subr.bf16.mxu0 0
        %2040 = vmatpush2.bf16.msra.mxu0 0
        %2041 = vmatprep.mubr.bf16.mxu0 0
        %2042 = vmatmul.mubr.bf16.gmra.mxu0 %v2007
        %v2043 = vpop.f32.mrf.mxu0
        %v2044 = vadd.f32 0.0, %v2043
        %v2045 = vpop.f32.mrf.mxu0
        %v2046 = vpop.f32.mrf.mxu0
        %v2047 = vadd.f32 0.0, %v2046
        %v2048 = vpop.f32.mrf.mxu0
        %2049 = vdwg.mxu0
        %v2051 = vsel %vm1217, %v1518, 0
        %2053 = vmatprep.subr.bf16.mxu0 0
        %2054 = vmatpush1.bf16.msra.mxu0 0
        %2055 = vmatprep.subr.bf16.mxu0 0
        %2056 = vmatpush1.bf16.msra.mxu0 0
        %2057 = vmatprep.subr.bf16.mxu0 0
        %2058 = vmatpush1.bf16.msra.mxu0 0
        %2059 = vmatprep.subr.bf16.mxu0 0
        %2060 = vmatpush1.bf16.msra.mxu0 0
        %2061 = vmatprep.subr.bf16.mxu0 0
        %2062 = vmatpush1.bf16.msra.mxu0 0
        %2063 = vmatprep.subr.bf16.mxu0 0
        %2064 = vmatpush1.bf16.msra.mxu0 0
        %2065 = vmatprep.subr.bf16.mxu0 0
        %2066 = vmatpush1.bf16.msra.mxu0 0
        %2067 = vmatprep.subr.bf16.mxu0 0
        %2068 = vmatpush1.bf16.msra.mxu0 %v412
        %2069 = vmatprep.subr.bf16.mxu0 0
        %2070 = vmatpush2.bf16.msra.mxu0 0
        %2071 = vmatprep.subr.bf16.mxu0 0
        %2072 = vmatpush2.bf16.msra.mxu0 0
        %2073 = vmatprep.subr.bf16.mxu0 0
        %2074 = vmatpush2.bf16.msra.mxu0 0
        %2075 = vmatprep.subr.bf16.mxu0 0
        %2076 = vmatpush2.bf16.msra.mxu0 0
        %2077 = vmatprep.subr.bf16.mxu0 0
        %2078 = vmatpush2.bf16.msra.mxu0 0
        %2079 = vmatprep.subr.bf16.mxu0 0
        %2080 = vmatpush2.bf16.msra.mxu0 0
        %2081 = vmatprep.subr.bf16.mxu0 0
        %2082 = vmatpush2.bf16.msra.mxu0 0
        %2083 = vmatprep.subr.bf16.mxu0 0
        %2084 = vmatpush2.bf16.msra.mxu0 0
        %2085 = vmatprep.mubr.bf16.mxu0 0
        %2086 = vmatmul.mubr.bf16.gmra.mxu0 %v2051
        %v2087 = vpop.f32.mrf.mxu0
        %v2088 = vadd.f32 0.0, %v2087
        %v2089 = vpop.f32.mrf.mxu0
        %v2090 = vpop.f32.mrf.mxu0
        %v2091 = vadd.f32 0.0, %v2090
        %v2092 = vpop.f32.mrf.mxu0
        %2093 = vdwg.mxu0
        %v2095 = vsel %vm1217, %v1519, 0
        %2097 = vmatprep.subr.bf16.mxu0 0
        %2098 = vmatpush1.bf16.msra.mxu0 0
        %2099 = vmatprep.subr.bf16.mxu0 0
        %2100 = vmatpush1.bf16.msra.mxu0 0
        %2101 = vmatprep.subr.bf16.mxu0 0
        %2102 = vmatpush1.bf16.msra.mxu0 0
        %2103 = vmatprep.subr.bf16.mxu0 0
        %2104 = vmatpush1.bf16.msra.mxu0 0
        %2105 = vmatprep.subr.bf16.mxu0 0
        %2106 = vmatpush1.bf16.msra.mxu0 0
        %2107 = vmatprep.subr.bf16.mxu0 0
        %2108 = vmatpush1.bf16.msra.mxu0 0
        %2109 = vmatprep.subr.bf16.mxu0 0
        %2110 = vmatpush1.bf16.msra.mxu0 0
        %2111 = vmatprep.subr.bf16.mxu0 0
        %2112 = vmatpush1.bf16.msra.mxu0 %v413
        %2113 = vmatprep.subr.bf16.mxu0 0
        %2114 = vmatpush2.bf16.msra.mxu0 0
        %2115 = vmatprep.subr.bf16.mxu0 0
        %2116 = vmatpush2.bf16.msra.mxu0 0
        %2117 = vmatprep.subr.bf16.mxu0 0
        %2118 = vmatpush2.bf16.msra.mxu0 0
        %2119 = vmatprep.subr.bf16.mxu0 0
        %2120 = vmatpush2.bf16.msra.mxu0 0
        %2121 = vmatprep.subr.bf16.mxu0 0
        %2122 = vmatpush2.bf16.msra.mxu0 0
        %2123 = vmatprep.subr.bf16.mxu0 0
        %2124 = vmatpush2.bf16.msra.mxu0 0
        %2125 = vmatprep.subr.bf16.mxu0 0
        %2126 = vmatpush2.bf16.msra.mxu0 0
        %2127 = vmatprep.subr.bf16.mxu0 0
        %2128 = vmatpush2.bf16.msra.mxu0 0
        %2129 = vmatprep.mubr.bf16.mxu0 0
        %2130 = vmatmul.mubr.bf16.gmra.mxu0 %v2095
        %v2131 = vpop.f32.mrf.mxu0
        %v2132 = vadd.f32 0.0, %v2131
        %v2133 = vpop.f32.mrf.mxu0
        %v2134 = vpop.f32.mrf.mxu0
        %v2135 = vadd.f32 0.0, %v2134
        %v2136 = vpop.f32.mrf.mxu0
        %2137 = vdwg.mxu0
        %v2139 = vsel %vm1217, %v1520, 0
        %2141 = vmatprep.subr.bf16.mxu0 0
        %2142 = vmatpush1.bf16.msra.mxu0 0
        %2143 = vmatprep.subr.bf16.mxu0 0
        %2144 = vmatpush1.bf16.msra.mxu0 0
        %2145 = vmatprep.subr.bf16.mxu0 0
        %2146 = vmatpush1.bf16.msra.mxu0 0
        %2147 = vmatprep.subr.bf16.mxu0 0
        %2148 = vmatpush1.bf16.msra.mxu0 0
        %2149 = vmatprep.subr.bf16.mxu0 0
        %2150 = vmatpush1.bf16.msra.mxu0 0
        %2151 = vmatprep.subr.bf16.mxu0 0
        %2152 = vmatpush1.bf16.msra.mxu0 0
        %2153 = vmatprep.subr.bf16.mxu0 0
        %2154 = vmatpush1.bf16.msra.mxu0 0
        %2155 = vmatprep.subr.bf16.mxu0 0
        %2156 = vmatpush1.bf16.msra.mxu0 %v414
        %2157 = vmatprep.subr.bf16.mxu0 0
        %2158 = vmatpush2.bf16.msra.mxu0 0
        %2159 = vmatprep.subr.bf16.mxu0 0
        %2160 = vmatpush2.bf16.msra.mxu0 0
        %2161 = vmatprep.subr.bf16.mxu0 0
        %2162 = vmatpush2.bf16.msra.mxu0 0
        %2163 = vmatprep.subr.bf16.mxu0 0
        %2164 = vmatpush2.bf16.msra.mxu0 0
        %2165 = vmatprep.subr.bf16.mxu0 0
        %2166 = vmatpush2.bf16.msra.mxu0 0
        %2167 = vmatprep.subr.bf16.mxu0 0
        %2168 = vmatpush2.bf16.msra.mxu0 0
        %2169 = vmatprep.subr.bf16.mxu0 0
        %2170 = vmatpush2.bf16.msra.mxu0 0
        %2171 = vmatprep.subr.bf16.mxu0 0
        %2172 = vmatpush2.bf16.msra.mxu0 0
        %2173 = vmatprep.mubr.bf16.mxu0 0
        %2174 = vmatmul.mubr.bf16.gmra.mxu0 %v2139
        %v2175 = vpop.f32.mrf.mxu0
        %v2176 = vadd.f32 0.0, %v2175
        %v2177 = vpop.f32.mrf.mxu0
        %v2178 = vpop.f32.mrf.mxu0
        %v2179 = vadd.f32 0.0, %v2178
        %v2180 = vpop.f32.mrf.mxu0
        %2181 = vdwg.mxu0
        %v2183 = vsel %vm1217, %v1521, 0
        %2185 = vmatprep.subr.bf16.mxu0 0
        %2186 = vmatpush1.bf16.msra.mxu0 0
        %2187 = vmatprep.subr.bf16.mxu0 0
        %2188 = vmatpush1.bf16.msra.mxu0 0
        %2189 = vmatprep.subr.bf16.mxu0 0
        %2190 = vmatpush1.bf16.msra.mxu0 0
        %2191 = vmatprep.subr.bf16.mxu0 0
        %2192 = vmatpush1.bf16.msra.mxu0 0
        %2193 = vmatprep.subr.bf16.mxu0 0
        %2194 = vmatpush1.bf16.msra.mxu0 0
        %2195 = vmatprep.subr.bf16.mxu0 0
        %2196 = vmatpush1.bf16.msra.mxu0 0
        %2197 = vmatprep.subr.bf16.mxu0 0
        %2198 = vmatpush1.bf16.msra.mxu0 0
        %2199 = vmatprep.subr.bf16.mxu0 0
        %2200 = vmatpush1.bf16.msra.mxu0 %v415
        %2201 = vmatprep.subr.bf16.mxu0 0
        %2202 = vmatpush2.bf16.msra.mxu0 0
        %2203 = vmatprep.subr.bf16.mxu0 0
        %2204 = vmatpush2.bf16.msra.mxu0 0
        %2205 = vmatprep.subr.bf16.mxu0 0
        %2206 = vmatpush2.bf16.msra.mxu0 0
        %2207 = vmatprep.subr.bf16.mxu0 0
        %2208 = vmatpush2.bf16.msra.mxu0 0
        %2209 = vmatprep.subr.bf16.mxu0 0
        %2210 = vmatpush2.bf16.msra.mxu0 0
        %2211 = vmatprep.subr.bf16.mxu0 0
        %2212 = vmatpush2.bf16.msra.mxu0 0
        %2213 = vmatprep.subr.bf16.mxu0 0
        %2214 = vmatpush2.bf16.msra.mxu0 0
        %2215 = vmatprep.subr.bf16.mxu0 0
        %2216 = vmatpush2.bf16.msra.mxu0 0
        %2217 = vmatprep.mubr.bf16.mxu0 0
        %2218 = vmatmul.mubr.bf16.gmra.mxu0 %v2183
        %v2219 = vpop.f32.mrf.mxu0
        %v2220 = vadd.f32 0.0, %v2219
        %v2221 = vpop.f32.mrf.mxu0
        %v2222 = vpop.f32.mrf.mxu0
        %v2223 = vadd.f32 0.0, %v2222
        %v2224 = vpop.f32.mrf.mxu0
        %2225 = vdwg.mxu0
        %v2226 = vrcp.pop %v1412
        %v2227 = vrcp.pop %v1415
        %v2228 = vrcp.pop %v1418
        %v2229 = vrcp.pop %v1421
        %v2230 = vrcp.pop %v1424
        %v2231 = vrcp.pop %v1427
        %v2232 = vrcp.pop %v1430
        %v2233 = vrcp.pop %v1433
        %v2234 = vrcp.pop %v1436
        %v2235 = vrcp.pop %v1439
        %v2236 = vrcp.pop %v1442
        %v2237 = vrcp.pop %v1445
        %v2238 = vrcp.pop %v1448
        %v2239 = vrcp.pop %v1451
        %v2240 = vrcp.pop %v1454
        %v2241 = vrcp.pop %v1457
        %v2242 = vrcp.pop %v1460
        %v2243 = vrcp.pop %v1463
        %v2244 = vrcp.pop %v1466
        %v2245 = vrcp.pop %v1469
        %v2246 = vrcp.pop %v1472
        %v2247 = vrcp.pop %v1475
        %v2248 = vrcp.pop %v1478
        %v2249 = vrcp.pop %v1481
        %v2250 = vrcp.pop %v1484
        %v2251 = vrcp.pop %v1487
        %v2252 = vrcp.pop %v1490
        %v2253 = vrcp.pop %v1493
        %v2254 = vrcp.pop %v1496
        %v2255 = vrcp.pop %v1499
        %v2256 = vrcp.pop %v1502
        %v2257 = vrcp.pop %v1505
        %v2258 = vmul.f32 %v1560, %v2226
        %v2259 = vmul.f32 %v1563, %v2227
        %v2260 = vmul.f32 %v1604, %v2228
        %v2261 = vmul.f32 %v1607, %v2229
        %v2262 = vmul.f32 %v1648, %v2230
        %v2263 = vmul.f32 %v1651, %v2231
        %v2264 = vmul.f32 %v1692, %v2232
        %v2265 = vmul.f32 %v1695, %v2233
        %v2266 = vmul.f32 %v1736, %v2234
        %v2267 = vmul.f32 %v1739, %v2235
        %v2268 = vmul.f32 %v1780, %v2236
        %v2269 = vmul.f32 %v1783, %v2237
        %v2270 = vmul.f32 %v1824, %v2238
        %v2271 = vmul.f32 %v1827, %v2239
        %v2272 = vmul.f32 %v1868, %v2240
        %v2273 = vmul.f32 %v1871, %v2241
        %v2274 = vmul.f32 %v1912, %v2242
        %v2275 = vmul.f32 %v1915, %v2243
        %v2276 = vmul.f32 %v1956, %v2244
        %v2277 = vmul.f32 %v1959, %v2245
        %v2278 = vmul.f32 %v2000, %v2246
        %v2279 = vmul.f32 %v2003, %v2247
        %v2280 = vmul.f32 %v2044, %v2248
        %v2281 = vmul.f32 %v2047, %v2249
        %v2282 = vmul.f32 %v2088, %v2250
        %v2283 = vmul.f32 %v2091, %v2251
        %v2284 = vmul.f32 %v2132, %v2252
        %v2285 = vmul.f32 %v2135, %v2253
        %v2286 = vmul.f32 %v2176, %v2254
        %v2287 = vmul.f32 %v2179, %v2255
        %v2288 = vmul.f32 %v2220, %v2256
        %v2289 = vmul.f32 %v2223, %v2257
        %2298 = vrot.lane.b32.xlu0 %v2266, 32
        %v2299 = vpop.permute.xlu0 %2298
        %2300 = vrot.lane.b32.xlu0 %v2267, 32
        %v2301 = vpop.permute.xlu0 %2300
        %2302 = vrot.lane.b32.xlu0 %v2268, 32
        %v2303 = vpop.permute.xlu0 %2302
        %2304 = vrot.lane.b32.xlu0 %v2269, 32
        %v2305 = vpop.permute.xlu0 %2304
        %2306 = vrot.lane.b32.xlu0 %v2270, 32
        %v2307 = vpop.permute.xlu0 %2306
        %2308 = vrot.lane.b32.xlu0 %v2271, 32
        %v2309 = vpop.permute.xlu0 %2308
        %2310 = vrot.lane.b32.xlu0 %v2272, 32
        %v2311 = vpop.permute.xlu0 %2310
        %2312 = vrot.lane.b32.xlu0 %v2273, 32
        %v2313 = vpop.permute.xlu0 %2312
        %2330 = vrot.lane.b32.xlu0 %v2274, 64
        %v2331 = vpop.permute.xlu0 %2330
        %2332 = vrot.lane.b32.xlu0 %v2275, 64
        %v2333 = vpop.permute.xlu0 %2332
        %2334 = vrot.lane.b32.xlu0 %v2276, 64
        %v2335 = vpop.permute.xlu0 %2334
        %2336 = vrot.lane.b32.xlu0 %v2277, 64
        %v2337 = vpop.permute.xlu0 %2336
        %2338 = vrot.lane.b32.xlu0 %v2278, 64
        %v2339 = vpop.permute.xlu0 %2338
        %2340 = vrot.lane.b32.xlu0 %v2279, 64
        %v2341 = vpop.permute.xlu0 %2340
        %2342 = vrot.lane.b32.xlu0 %v2280, 64
        %v2343 = vpop.permute.xlu0 %2342
        %2344 = vrot.lane.b32.xlu0 %v2281, 64
        %v2345 = vpop.permute.xlu0 %2344
        %2362 = vrot.lane.b32.xlu0 %v2282, 96
        %v2363 = vpop.permute.xlu0 %2362
        %2364 = vrot.lane.b32.xlu0 %v2283, 96
        %v2365 = vpop.permute.xlu0 %2364
        %2366 = vrot.lane.b32.xlu0 %v2284, 96
        %v2367 = vpop.permute.xlu0 %2366
        %2368 = vrot.lane.b32.xlu0 %v2285, 96
        %v2369 = vpop.permute.xlu0 %2368
        %2370 = vrot.lane.b32.xlu0 %v2286, 96
        %v2371 = vpop.permute.xlu0 %2370
        %2372 = vrot.lane.b32.xlu0 %v2287, 96
        %v2373 = vpop.permute.xlu0 %2372
        %2374 = vrot.lane.b32.xlu0 %v2288, 96
        %v2375 = vpop.permute.xlu0 %2374
        %2376 = vrot.lane.b32.xlu0 %v2289, 96
        %v2377 = vpop.permute.xlu0 %2376
        %v2386 = vsel %vm464, %v2258, %v2299
        %v2387 = vsel %vm464, %v2259, %v2301
        %v2388 = vsel %vm464, %v2260, %v2303
        %v2389 = vsel %vm464, %v2261, %v2305
        %v2390 = vsel %vm464, %v2262, %v2307
        %v2391 = vsel %vm464, %v2263, %v2309
        %v2392 = vsel %vm464, %v2264, %v2311
        %v2393 = vsel %vm464, %v2265, %v2313
        %vm2394 = vcmask 523264
        %v2395 = vsel %vm2394, %v2386, %v2331
        %v2396 = vsel %vm2394, %v2387, %v2333
        %v2397 = vsel %vm2394, %v2388, %v2335
        %v2398 = vsel %vm2394, %v2389, %v2337
        %v2399 = vsel %vm2394, %v2390, %v2339
        %v2400 = vsel %vm2394, %v2391, %v2341
        %v2401 = vsel %vm2394, %v2392, %v2343
        %v2402 = vsel %vm2394, %v2393, %v2345
        %vm2403 = vcmask 785408
        %v2404 = vsel %vm2403, %v2395, %v2363
        %v2405 = vsel %vm2403, %v2396, %v2365
        %v2406 = vsel %vm2403, %v2397, %v2367
        %v2407 = vsel %vm2403, %v2398, %v2369
        %v2408 = vsel %vm2403, %v2399, %v2371
        %v2409 = vsel %vm2403, %v2400, %v2373
        %v2410 = vsel %vm2403, %v2401, %v2375
        %v2411 = vsel %vm2403, %v2402, %v2377
        %v2412 = vld [vmem:[%s167] sm:$0xff]
        %v2413 = vld [vmem:[%s167 + $0x8] sm:$0xff]
        %v2414 = vld [vmem:[%s167 + $0x10] sm:$0xff]
        %v2415 = vld [vmem:[%s167 + $0x18] sm:$0xff]
        %v2416 = vld [vmem:[%s167 + $0x20] sm:$0xff]
        %v2417 = vld [vmem:[%s167 + $0x28] sm:$0xff]
        %v2418 = vld [vmem:[%s167 + $0x30] sm:$0xff]
        %v2419 = vld [vmem:[%s167 + $0x38] sm:$0xff]
        %v2420 = vadd.f32 %v2412, %v2404
        %v2421 = vadd.f32 %v2413, %v2405
        %v2422 = vadd.f32 %v2414, %v2406
        %v2423 = vadd.f32 %v2415, %v2407
        %v2424 = vadd.f32 %v2416, %v2408
        %v2425 = vadd.f32 %v2417, %v2409
        %v2426 = vadd.f32 %v2418, %v2410
        %v2427 = vadd.f32 %v2419, %v2411
        %2428 = vst [vmem:[%s189] sm:$0xff] %v2420
        %2429 = vst [vmem:[%s189 + $0x8] sm:$0xff] %v2421
        %2430 = vst [vmem:[%s189 + $0x10] sm:$0xff] %v2422
        %2431 = vst [vmem:[%s189 + $0x18] sm:$0xff] %v2423
        %2432 = vst [vmem:[%s189 + $0x20] sm:$0xff] %v2424
        %2433 = vst [vmem:[%s189 + $0x28] sm:$0xff] %v2425
        %2434 = vst [vmem:[%s189 + $0x30] sm:$0xff] %v2426
        %2435 = vst [vmem:[%s189 + $0x38] sm:$0xff] %v2427
        %s2436 = sand.u32 %s96, 1
        %s2437 = scalar_lea.sflag [#allocation4], %s2436
        %s2438 = sand.u32 %s96, 1
        %s2439 = smul.addr %s2438, 64
        %s2440 = scalar_lea.vmem [#allocation5], %s2439
        // Predicated region
        $region37: #{tpu_custom_call.1} parent=31 // pred_check
          %p2441 = pneg %p106
        $region38: #{tpu_custom_call.1} parent=31 // pred_check_branch
          %2443 = sbr.rel (%p2441) target = $region40
        $region39: #{tpu_custom_call.1} parent=31 // pred_region
          %s2444 = smul.u32 4, %s20
          %s2446 = ssub.s32 1024, 1024
          %2447 = vsyncadd %s2437, %s2446
          %s2448 = smul.addr %s2444, 2
          %s2449 = smul.addr %s2448, 128
          %s2450 = scalar_lea.hbm %s3, %s2449
          %s2451 = sshll.u32 %s2440, 4
          %s2452 = int_to_ptr.vmem [resolvable:$true] %s2451
          %2457 = dma.vmem_to_hbm [thread:$0]  %s2452, 1024, %s2450, %s2437, 128, 128, 8
        $region40: #{tpu_custom_call.1} parent=31 // pred_fallthru
          _
      $region32: #{tpu_custom_call.1} parent=5 // pred_fallthru
        _
      %p2458 = scmp.le.s32.totalorder 2, %s15
      // Predicated region
      $region41: #{tpu_custom_call.1} parent=5 // pred_check
        %p2459 = pneg %p2458
      $region42: #{tpu_custom_call.1} parent=5 // pred_check_branch
        %2461 = sbr.rel (%p2459) target = $region44
      $region43: #{tpu_custom_call.1} parent=5 // pred_region
        %s2462 = ssub.s32 %s15, 2
        // Predicated region
        $region45: #{tpu_custom_call.1} parent=43 // pred_check
          %p2463 = pneg %p112
        $region46: #{tpu_custom_call.1} parent=43 // pred_check_branch
          %2465 = sbr.rel (%p2463) target = $region48
        $region47: #{tpu_custom_call.1} parent=43 // pred_region
          %s2466 = sand.u32 %s97, 1
          %s2467 = scalar_lea.sflag [#allocation4], %s2466
          %s2468 = sand.u32 %s97, 1
          %s2469 = smul.addr %s2468, 64
          %s2470 = scalar_lea.vmem [#allocation5], %s2469
          %2471 = dma.done %s2467, 1024
        $region48: #{tpu_custom_call.1} parent=43 // pred_fallthru
          _
      $region44: #{tpu_custom_call.1} parent=5 // pred_fallthru
        _
    $region6: #{tpu_custom_call.1} parent=1 // loop_footer
      %s19 = sadd.s32 1, %s15
    $region7: #{tpu_custom_call.1} parent=1 // loop_footer_branch
      %14 = sbr.rel target = $region3
    $region8: #{tpu_custom_call.1} parent=1 // loop_exit
      _
    %2472 = vsyncpa [#allocation3], 1
    %s2473 = scalar_lea.sflag [#allocation3], 1
    %2474 = vsyncpa %s2473, 1
    %2475 = vsyncpa [#allocation4], 1
    %s2476 = scalar_lea.sflag [#allocation4], 1
    %2477 = vsyncpa %s2476, 1

</llo_original>
